<compile_context>
chip_gen: v6e
topology: v6e:2x2x1
jax: 0.10.0
libtpu: 0.0.40
codegen_flags: <defaults>
</compile_context>

<pallas_src>
from functools import partial

import jax
import jax.numpy as jnp
from jax.experimental import pallas as pl
from jax.experimental.pallas import tpu as pltpu


SUBB = 8  # batch rows handled per grid step (one f32 sublane group)


# ----------------------------------------------------------------------------
# Kernel
# ----------------------------------------------------------------------------
def lstm_mlp_kernel(x_ref,      # (T*SUBB, Dp)    rows ordered t*SUBB + local_b
                    wih_ref,    # (Dp, 4*Hp)      fused input->gate weights (i,f,o,g)
                    whh_ref,    # (Hp, 4*Hp)      fused hidden->gate weights (i,f,o,g)
                    b_ref,      # (1, 4*Hp)       b_ih + b_hh, fused/padded, f32
                    w1_ref,     # (Hp, P)         dense1 weight, cols 20..P-1 zero
                    b1_ref,     # (1, P)          f32
                    w2_ref,     # (P, P)          dense2 weight, only col 0 real
                    b2_ref,     # (1, P)          f32, only col 0 real
                    out_ref,    # (outlen*SUBB, P) col 0 = sigmoid(dense2(...))
                    xg_ref):    # VMEM scratch (T*SUBB, 4*Hp) f32
    TB, _ = x_ref.shape
    Hp = whh_ref.shape[0]
    T = TB // SUBB
    outlen = out_ref.shape[0] // SUBB
    H3 = 3 * Hp

    # ---- hoisted input projection: one matmul covers every timestep ---------
    # Landed in VMEM scratch so the unrolled recurrence below only carries
    # h / c in vregs (no 32-vreg xg value to spill).
    xg_ref[...] = jnp.dot(x_ref[...], wih_ref[...],
                          preferred_element_type=jnp.float32) + b_ref[...]

    # h / c live in registers; padded lanes stay exactly zero (see header).
    h = jnp.zeros((SUBB, Hp), jnp.float32)
    c = jnp.zeros((SUBB, Hp), jnp.float32)

    last_h = []
    # Fully unrolled recurrence (T small & static). Only h @ Whh sits on the
    # sequential critical path; Whh is bf16 by default -> fewer MXU passes.
    for t in range(T):
        g = xg_ref[pl.ds(t * SUBB, SUBB), :] + jnp.dot(
            h.astype(whh_ref.dtype), whh_ref[...],
            preferred_element_type=jnp.float32)
        # Gate order packed as (i, f, o, g): one wide sigmoid + one tanh.
        s = jax.nn.sigmoid(g[:, :H3])
        i_g = s[:, 0 * Hp:1 * Hp]
        f_g = s[:, 1 * Hp:2 * Hp]
        o_g = s[:, 2 * Hp:3 * Hp]
        g_g = jnp.tanh(g[:, H3:])
        c = f_g * c + i_g * g_g
        h = o_g * jnp.tanh(c)
        if t >= T - outlen:          # keep only the last `outlen` hidden states
            last_h.append(h)

    # TODO(synk): nn.Dropout(p=0.2) is identity in eval mode; training-mode RNG
    # masking is intentionally not applied here.

    # MLP head on the last `outlen` steps (dense1 is per-timestep, so slicing
    # before dense1 is equivalent to the PyTorch forward).
    hs = jnp.concatenate(last_h, axis=0)                         # (outlen*SUBB, Hp)
    d1 = jnp.tanh(jnp.dot(hs.astype(w1_ref.dtype), w1_ref[...],
                          preferred_element_type=jnp.float32) + b1_ref[...])
    d2 = jax.nn.sigmoid(jnp.dot(d1.astype(w2_ref.dtype), w2_ref[...],
                                preferred_element_type=jnp.float32) + b2_ref[...])
    out_ref[...] = d2                                            # lane-dense store


# ----------------------------------------------------------------------------
# One-time parameter packing (cache the result across forward calls)
# ----------------------------------------------------------------------------
def _round_up(n, m):
    return ((n + m - 1) // m) * m


# PyTorch LSTM gate order (i, f, g, o) -> kernel order (i, f, o, g).
_GATE_ORDER = (0, 1, 3, 2)


def pack_params(params, compute_dtype=jnp.bfloat16):
    """Fuse + pad PyTorch-style params into the kernel layout. Call ONCE.

    compute_dtype: dtype of MXU operands (bf16 default on all generations;
    accumulation and all elementwise math stay f32 inside the kernel).
    """
    D = params["wih"].shape[1]
    H = params["whh"].shape[-1]                  # 80
    Hp = _round_up(H, 128)                       # 128
    Dp = _round_up(D, 16)                        # 16 (bf16 sublane tile), not 128
    P = 128                                      # dense1/dense2 padded width

    def pack_gates(w, rows, rows_p):
        # w: (4, rows, H) -> (rows_p, 4*Hp); kernel gate k occupies
        # cols [k*Hp, k*Hp+H) with k following _GATE_ORDER.
        out = jnp.zeros((rows_p, 4 * Hp), jnp.float32)
        for k, g in enumerate(_GATE_ORDER):
            out = out.at[:rows, k * Hp:k * Hp + H].set(w[g])
        return out

    wih = pack_gates(params["wih"], D, Dp)                        # (Dp, 4Hp)
    whh = pack_gates(params["whh"], H, Hp)                        # (Hp, 4Hp)
    b = jnp.zeros((1, 4 * Hp), jnp.float32)
    for k, g in enumerate(_GATE_ORDER):
        b = b.at[:, k * Hp:k * Hp + H].set(params["b"][g])

    n1 = params["w1"].shape[1]                                    # 20
    w1 = jnp.zeros((Hp, P), jnp.float32).at[:H, :n1].set(params["w1"])
    b1 = jnp.zeros((1, P), jnp.float32).at[:, :n1].set(params["b1"])
    w2 = jnp.zeros((P, P), jnp.float32).at[:n1, 0:1].set(params["w2"])
    b2 = jnp.zeros((1, P), jnp.float32).at[:, 0:1].set(params["b2"])

    # Matmul operands in compute_dtype; biases stay f32 (added post-accum).
    return (wih.astype(compute_dtype), whh.astype(compute_dtype), b,
            w1.astype(compute_dtype), b1,
            w2.astype(compute_dtype), b2)


# ----------------------------------------------------------------------------
# Forward wrapper (jitted; only x padding/layout happens per call)
# ----------------------------------------------------------------------------
@partial(jax.jit, static_argnames=("outlen",))
def network_forward(x, packed, outlen):
    """x: (B, T, indim) float32, packed = pack_params(...) -> (B, outlen, 1) f32."""
    wih, whh, b, w1, b1, w2, b2 = packed
    B, T, D = x.shape
    Dp = wih.shape[0]
    Hp = whh.shape[0]
    P = w1.shape[1]
    G4 = 4 * Hp

    n_tiles = pl.cdiv(B, SUBB)
    Bp = n_tiles * SUBB

    # time-major, pad batch (sublanes) and features (lanes), then lay out as
    # (batch_tile, t*SUBB + local_b, Dp) so each grid step reads one aligned
    # contiguous slab and the kernel never reshapes x.
    x_tbd = jnp.transpose(x, (1, 0, 2))                                   # (T,B,D)
    x_pad = jnp.zeros((T, Bp, Dp), jnp.float32).at[:, :B, :D].set(x_tbd)
    x_pack = (x_pad.reshape(T, n_tiles, SUBB, Dp)
              .transpose(1, 0, 2, 3)
              .reshape(n_tiles, T * SUBB, Dp)
              .astype(wih.dtype))

    out = pl.pallas_call(
        lstm_mlp_kernel,
        out_shape=jax.ShapeDtypeStruct((n_tiles, outlen * SUBB, P), jnp.float32),
        grid=(n_tiles,),
        in_specs=[
            pl.BlockSpec((None, T * SUBB, Dp), lambda bt: (bt, 0, 0)),
            pl.BlockSpec((Dp, G4), lambda bt: (0, 0)),
            pl.BlockSpec((Hp, G4), lambda bt: (0, 0)),
            pl.BlockSpec((1, G4), lambda bt: (0, 0)),
            pl.BlockSpec((Hp, P), lambda bt: (0, 0)),
            pl.BlockSpec((1, P), lambda bt: (0, 0)),
            pl.BlockSpec((P, P), lambda bt: (0, 0)),
            pl.BlockSpec((1, P), lambda bt: (0, 0)),
        ],
        out_specs=pl.BlockSpec((None, outlen * SUBB, P), lambda bt: (bt, 0, 0)),
        scratch_shapes=[pltpu.VMEM((T * SUBB, G4), jnp.float32)],
        compiler_params=pltpu.CompilerParams(
            dimension_semantics=("parallel",)),   # batch tiles shard over TCs (v7x)
    )(x_pack, wih, whh, b, w1, b1, w2, b2)

    # out[bt, k*SUBB + lb, 0] holds sigmoid(dense2(...)) for time (T-outlen+k),
    # batch bt*SUBB + lb.  Columns 1..P-1 are padding (sigmoid(0)=0.5): ignored.
    col = out[:, :, 0].reshape(n_tiles, outlen, SUBB)        # (nt, outlen, SUBB)
    col = jnp.transpose(col, (0, 2, 1)).reshape(Bp, outlen)  # (Bp, outlen)
    return col[:B, :, None]                                  # (B, outlen, 1)


# ----------------------------------------------------------------------------
# Pure-JAX reference (mirrors the PyTorch module) + synthetic params
# ----------------------------------------------------------------------------
def network_forward_ref(x, params, outlen):
    B, T, D = x.shape
    H = params["whh"].shape[-1]
    h = jnp.zeros((B, H), jnp.float32)
    c = jnp.zeros((B, H), jnp.float32)
    hs = []
    for t in range(T):
        xt = x[:, t, :]
        pre = [xt @ params["wih"][g] + h @ params["whh"][g] + params["b"][g]
               for g in range(4)]
        i_g = jax.nn.sigmoid(pre[0])
        f_g = jax.nn.sigmoid(pre[1])
        g_g = jnp.tanh(pre[2])
        o_g = jax.nn.sigmoid(pre[3])
        c = f_g * c + i_g * g_g
        h = o_g * jnp.tanh(c)
        hs.append(h)
    hs = jnp.stack(hs, axis=1)                                   # (B, T, H)
    d1 = jnp.tanh(hs @ params["w1"] + params["b1"])
    d2 = jax.nn.sigmoid(d1[:, -outlen:, :] @ params["w2"] + params["b2"])
    return d2


def make_params(key, indim, hidden):
    """Synthetic params matching the PyTorch module (gate order i, f, g, o).

    PyTorch's (4H, D)/(4H, H) LSTM weights are stored stacked-and-transposed as
    (4, D, H)/(4, H, H); dense weights are stored pre-transposed.
    """
    ks = jax.random.split(key, 8)
    scale = 0.1
    wih = scale * jax.random.normal(ks[0], (4, indim, hidden), jnp.float32)
    whh = scale * jax.random.normal(ks[1], (4, hidden, hidden), jnp.float32)
    b_ih = scale * jax.random.normal(ks[2], (4, 1, hidden), jnp.float32)
    b_hh = scale * jax.random.normal(ks[3], (4, 1, hidden), jnp.float32)
    w1 = scale * jax.random.normal(ks[4], (hidden, 20), jnp.float32)
    b1 = scale * jax.random.normal(ks[5], (1, 20), jnp.float32)
    w2 = scale * jax.random.normal(ks[6], (20, 1), jnp.float32)
    b2 = scale * jax.random.normal(ks[7], (1, 1), jnp.float32)
    return {
        "wih": wih, "whh": whh, "b": b_ih + b_hh,
        "w1": w1, "b1": b1, "w2": w2, "b2": b2,
    }


if __name__ == "__main__":
    # Shapes consistent with the module's forward:
    # batch=2, timestep=8, indim=4, hidden=80 (fixed in __init__), outlen=4.
    batch, timestep, indim, outlen = 2, 8, 4, 4
    hidden = 80

    key = jax.random.PRNGKey(0)
    k_x, k_p = jax.random.split(key)
    x = jax.random.normal(k_x, (batch, timestep, indim), jnp.float32)
    params = make_params(k_p, indim, hidden)
    ref = network_forward_ref(x, params, outlen)

    # --- f32 compute path: exact-semantics check (tight tolerance) ----------
    packed_f32 = pack_params(params, compute_dtype=jnp.float32)
    out_f32 = network_forward(x, packed_f32, outlen)
    jax.block_until_ready(out_f32)
    assert out_f32.shape == (batch, outlen, 1), out_f32.shape
    assert jnp.allclose(out_f32, ref, atol=1e-4, rtol=1e-4), (
        float(jnp.max(jnp.abs(out_f32 - ref))))

    # --- default bf16-MXU path (params packed ONCE, reused across calls) ----
    packed = pack_params(params)                       # bf16 MXU operands
    out = network_forward(x, packed, outlen)
    jax.block_until_ready(out)
    assert out.shape == (batch, outlen, 1), out.shape
    assert jnp.allclose(out, ref, atol=2e-2, rtol=2e-2), (
        float(jnp.max(jnp.abs(out - ref))))

    print("KERNEL_OK")
</pallas_src>

<mosaic_0001>
module attributes {stable_mosaic.version = 11 : i64} {
  func.func @lstm_mlp_kernel(%arg0: i32, %arg1: memref<1x64x16xf32, #tpu.memory_space<vmem>>, %arg2: memref<16x512xf32, #tpu.memory_space<vmem>>, %arg3: memref<128x512xf32, #tpu.memory_space<vmem>>, %arg4: memref<1x512xf32, #tpu.memory_space<vmem>>, %arg5: memref<128x128xf32, #tpu.memory_space<vmem>>, %arg6: memref<1x128xf32, #tpu.memory_space<vmem>>, %arg7: memref<128x128xf32, #tpu.memory_space<vmem>>, %arg8: memref<1x128xf32, #tpu.memory_space<vmem>>, %arg9: memref<1x32x128xf32, #tpu.memory_space<vmem>>, %arg10: memref<64x512xf32, #tpu.memory_space<vmem>>) attributes {dimension_semantics = [#tpu.dimension_semantics<parallel>], iteration_bounds = array<i64: 1>, scalar_prefetch = 0 : i64, scratch_operands = 1 : i64, tpu.core_type = #tpu.core_type<tc>, window_params = [{transform_indices = @transform_0, window_bounds = array<i64: 1, 64, 16>}, {pipeline_mode = #tpu.pipeline_mode<synchronous>, transform_indices = @transform_1, window_bounds = array<i64: 16, 512>}, {pipeline_mode = #tpu.pipeline_mode<synchronous>, transform_indices = @transform_2, window_bounds = array<i64: 128, 512>}, {pipeline_mode = #tpu.pipeline_mode<synchronous>, transform_indices = @transform_3, window_bounds = array<i64: 1, 512>}, {pipeline_mode = #tpu.pipeline_mode<synchronous>, transform_indices = @transform_4, window_bounds = array<i64: 128, 128>}, {pipeline_mode = #tpu.pipeline_mode<synchronous>, transform_indices = @transform_5, window_bounds = array<i64: 1, 128>}, {pipeline_mode = #tpu.pipeline_mode<synchronous>, transform_indices = @transform_6, window_bounds = array<i64: 128, 128>}, {pipeline_mode = #tpu.pipeline_mode<synchronous>, transform_indices = @transform_7, window_bounds = array<i64: 1, 128>}, {transform_indices = @transform_8, window_bounds = array<i64: 1, 32, 128>}]} {
    %c0 = arith.constant 0 : index
    %c0_0 = arith.constant 0 : index
    %c0_1 = arith.constant 0 : index
    %0 = vector.load %arg1[%c0, %c0_0, %c0_1] : memref<1x64x16xf32, #tpu.memory_space<vmem>>, vector<1x64x16xf32>
    %1 = vector.shape_cast %0 : vector<1x64x16xf32> to vector<64x16xf32>
    %c0_2 = arith.constant 0 : index
    %c0_3 = arith.constant 0 : index
    %2 = vector.load %arg2[%c0_2, %c0_3] : memref<16x512xf32, #tpu.memory_space<vmem>>, vector<16x512xf32>
    %cst = arith.constant dense<0.000000e+00> : vector<64x512xf32>
    %3 = tpu.matmul %1, %2, %cst {dimension_numbers = #tpu.dot_dimension_numbers<[1], [0], [0], [1], [0, 0, 1, 1], [], []>} : vector<64x16xf32>, vector<16x512xf32>, vector<64x512xf32> -> vector<64x512xf32>
    %c0_4 = arith.constant 0 : index
    %c0_5 = arith.constant 0 : index
    %4 = vector.load %arg4[%c0_4, %c0_5] : memref<1x512xf32, #tpu.memory_space<vmem>>, vector<1x512xf32>
    %5 = vector.broadcast %4 : vector<1x512xf32> to vector<64x512xf32>
    %6 = arith.addf %3, %5 : vector<64x512xf32>
    %c0_6 = arith.constant 0 : index
    %c0_7 = arith.constant 0 : index
    %7 = vector.load %arg10[%c0_6, %c0_7] : memref<64x512xf32, #tpu.memory_space<vmem>>, vector<64x512xf32>
    tpu.vector_store %arg10[%c0_6, %c0_7], %6 {strides = array<i32>} : memref<64x512xf32, #tpu.memory_space<vmem>>, vector<64x512xf32>,
    %cst_8 = arith.constant 0.000000e+00 : f32
    %8 = vector.broadcast %cst_8 : f32 to vector<8x128xf32>
    %cst_9 = arith.constant 0.000000e+00 : f32
    %9 = vector.broadcast %cst_9 : f32 to vector<8x128xf32>
    %c0_10 = arith.constant 0 : index
    %c0_11 = arith.constant 0 : index
    %10 = vector.load %arg10[%c0_10, %c0_11] : memref<64x512xf32, #tpu.memory_space<vmem>>, vector<8x512xf32>
    %c0_12 = arith.constant 0 : index
    %c0_13 = arith.constant 0 : index
    %11 = vector.load %arg3[%c0_12, %c0_13] : memref<128x512xf32, #tpu.memory_space<vmem>>, vector<128x512xf32>
    %cst_14 = arith.constant dense<0.000000e+00> : vector<8x512xf32>
    %12 = tpu.matmul %8, %11, %cst_14 {dimension_numbers = #tpu.dot_dimension_numbers<[1], [0], [0], [1], [0, 0, 1, 1], [], []>} : vector<8x128xf32>, vector<128x512xf32>, vector<8x512xf32> -> vector<8x512xf32>
    %13 = arith.addf %10, %12 : vector<8x512xf32>
    %14 = vector.extract_strided_slice %13 {offsets = [0, 0], sizes = [8, 384], strides = [1, 1]} : vector<8x512xf32> to vector<8x384xf32>
    %15 = arith.negf %14 : vector<8x384xf32>
    %16 = math.exp %15 : vector<8x384xf32>
    %cst_15 = arith.constant 1.000000e+00 : f32
    %17 = vector.broadcast %cst_15 : f32 to vector<8x384xf32>
    %18 = arith.addf %17, %16 : vector<8x384xf32>
    %19 = arith.divf %17, %18 : vector<8x384xf32>
    %20 = vector.extract_strided_slice %19 {offsets = [0, 0], sizes = [8, 128], strides = [1, 1]} : vector<8x384xf32> to vector<8x128xf32>
    %21 = vector.extract_strided_slice %19 {offsets = [0, 128], sizes = [8, 128], strides = [1, 1]} : vector<8x384xf32> to vector<8x128xf32>
    %22 = vector.extract_strided_slice %19 {offsets = [0, 256], sizes = [8, 128], strides = [1, 1]} : vector<8x384xf32> to vector<8x128xf32>
    %23 = vector.extract_strided_slice %13 {offsets = [0, 384], sizes = [8, 128], strides = [1, 1]} : vector<8x512xf32> to vector<8x128xf32>
    %24 = math.tanh %23 : vector<8x128xf32>
    %25 = arith.mulf %21, %9 : vector<8x128xf32>
    %26 = arith.mulf %20, %24 : vector<8x128xf32>
    %27 = arith.addf %25, %26 : vector<8x128xf32>
    %28 = math.tanh %27 : vector<8x128xf32>
    %29 = arith.mulf %22, %28 : vector<8x128xf32>
    %c8 = arith.constant 8 : index
    %c0_16 = arith.constant 0 : index
    %30 = vector.load %arg10[%c8, %c0_16] : memref<64x512xf32, #tpu.memory_space<vmem>>, vector<8x512xf32>
    %c0_17 = arith.constant 0 : index
    %c0_18 = arith.constant 0 : index
    %31 = vector.load %arg3[%c0_17, %c0_18] : memref<128x512xf32, #tpu.memory_space<vmem>>, vector<128x512xf32>
    %cst_19 = arith.constant dense<0.000000e+00> : vector<8x512xf32>
    %32 = tpu.matmul %29, %31, %cst_19 {dimension_numbers = #tpu.dot_dimension_numbers<[1], [0], [0], [1], [0, 0, 1, 1], [], []>} : vector<8x128xf32>, vector<128x512xf32>, vector<8x512xf32> -> vector<8x512xf32>
    %33 = arith.addf %30, %32 : vector<8x512xf32>
    %34 = vector.extract_strided_slice %33 {offsets = [0, 0], sizes = [8, 384], strides = [1, 1]} : vector<8x512xf32> to vector<8x384xf32>
    %35 = arith.negf %34 : vector<8x384xf32>
    %36 = math.exp %35 : vector<8x384xf32>
    %cst_20 = arith.constant 1.000000e+00 : f32
    %37 = vector.broadcast %cst_20 : f32 to vector<8x384xf32>
    %38 = arith.addf %37, %36 : vector<8x384xf32>
    %39 = arith.divf %37, %38 : vector<8x384xf32>
    %40 = vector.extract_strided_slice %39 {offsets = [0, 0], sizes = [8, 128], strides = [1, 1]} : vector<8x384xf32> to vector<8x128xf32>
    %41 = vector.extract_strided_slice %39 {offsets = [0, 128], sizes = [8, 128], strides = [1, 1]} : vector<8x384xf32> to vector<8x128xf32>
    %42 = vector.extract_strided_slice %39 {offsets = [0, 256], sizes = [8, 128], strides = [1, 1]} : vector<8x384xf32> to vector<8x128xf32>
    %43 = vector.extract_strided_slice %33 {offsets = [0, 384], sizes = [8, 128], strides = [1, 1]} : vector<8x512xf32> to vector<8x128xf32>
    %44 = math.tanh %43 : vector<8x128xf32>
    %45 = arith.mulf %41, %27 : vector<8x128xf32>
    %46 = arith.mulf %40, %44 : vector<8x128xf32>
    %47 = arith.addf %45, %46 : vector<8x128xf32>
    %48 = math.tanh %47 : vector<8x128xf32>
    %49 = arith.mulf %42, %48 : vector<8x128xf32>
    %c16 = arith.constant 16 : index
    %c0_21 = arith.constant 0 : index
    %50 = vector.load %arg10[%c16, %c0_21] : memref<64x512xf32, #tpu.memory_space<vmem>>, vector<8x512xf32>
    %c0_22 = arith.constant 0 : index
    %c0_23 = arith.constant 0 : index
    %51 = vector.load %arg3[%c0_22, %c0_23] : memref<128x512xf32, #tpu.memory_space<vmem>>, vector<128x512xf32>
    %cst_24 = arith.constant dense<0.000000e+00> : vector<8x512xf32>
    %52 = tpu.matmul %49, %51, %cst_24 {dimension_numbers = #tpu.dot_dimension_numbers<[1], [0], [0], [1], [0, 0, 1, 1], [], []>} : vector<8x128xf32>, vector<128x512xf32>, vector<8x512xf32> -> vector<8x512xf32>
    %53 = arith.addf %50, %52 : vector<8x512xf32>
    %54 = vector.extract_strided_slice %53 {offsets = [0, 0], sizes = [8, 384], strides = [1, 1]} : vector<8x512xf32> to vector<8x384xf32>
    %55 = arith.negf %54 : vector<8x384xf32>
    %56 = math.exp %55 : vector<8x384xf32>
    %cst_25 = arith.constant 1.000000e+00 : f32
    %57 = vector.broadcast %cst_25 : f32 to vector<8x384xf32>
    %58 = arith.addf %57, %56 : vector<8x384xf32>
    %59 = arith.divf %57, %58 : vector<8x384xf32>
    %60 = vector.extract_strided_slice %59 {offsets = [0, 0], sizes = [8, 128], strides = [1, 1]} : vector<8x384xf32> to vector<8x128xf32>
    %61 = vector.extract_strided_slice %59 {offsets = [0, 128], sizes = [8, 128], strides = [1, 1]} : vector<8x384xf32> to vector<8x128xf32>
    %62 = vector.extract_strided_slice %59 {offsets = [0, 256], sizes = [8, 128], strides = [1, 1]} : vector<8x384xf32> to vector<8x128xf32>
    %63 = vector.extract_strided_slice %53 {offsets = [0, 384], sizes = [8, 128], strides = [1, 1]} : vector<8x512xf32> to vector<8x128xf32>
    %64 = math.tanh %63 : vector<8x128xf32>
    %65 = arith.mulf %61, %47 : vector<8x128xf32>
    %66 = arith.mulf %60, %64 : vector<8x128xf32>
    %67 = arith.addf %65, %66 : vector<8x128xf32>
    %68 = math.tanh %67 : vector<8x128xf32>
    %69 = arith.mulf %62, %68 : vector<8x128xf32>
    %c24 = arith.constant 24 : index
    %c0_26 = arith.constant 0 : index
    %70 = vector.load %arg10[%c24, %c0_26] : memref<64x512xf32, #tpu.memory_space<vmem>>, vector<8x512xf32>
    %c0_27 = arith.constant 0 : index
    %c0_28 = arith.constant 0 : index
    %71 = vector.load %arg3[%c0_27, %c0_28] : memref<128x512xf32, #tpu.memory_space<vmem>>, vector<128x512xf32>
    %cst_29 = arith.constant dense<0.000000e+00> : vector<8x512xf32>
    %72 = tpu.matmul %69, %71, %cst_29 {dimension_numbers = #tpu.dot_dimension_numbers<[1], [0], [0], [1], [0, 0, 1, 1], [], []>} : vector<8x128xf32>, vector<128x512xf32>, vector<8x512xf32> -> vector<8x512xf32>
    %73 = arith.addf %70, %72 : vector<8x512xf32>
    %74 = vector.extract_strided_slice %73 {offsets = [0, 0], sizes = [8, 384], strides = [1, 1]} : vector<8x512xf32> to vector<8x384xf32>
    %75 = arith.negf %74 : vector<8x384xf32>
    %76 = math.exp %75 : vector<8x384xf32>
    %cst_30 = arith.constant 1.000000e+00 : f32
    %77 = vector.broadcast %cst_30 : f32 to vector<8x384xf32>
    %78 = arith.addf %77, %76 : vector<8x384xf32>
    %79 = arith.divf %77, %78 : vector<8x384xf32>
    %80 = vector.extract_strided_slice %79 {offsets = [0, 0], sizes = [8, 128], strides = [1, 1]} : vector<8x384xf32> to vector<8x128xf32>
    %81 = vector.extract_strided_slice %79 {offsets = [0, 128], sizes = [8, 128], strides = [1, 1]} : vector<8x384xf32> to vector<8x128xf32>
    %82 = vector.extract_strided_slice %79 {offsets = [0, 256], sizes = [8, 128], strides = [1, 1]} : vector<8x384xf32> to vector<8x128xf32>
    %83 = vector.extract_strided_slice %73 {offsets = [0, 384], sizes = [8, 128], strides = [1, 1]} : vector<8x512xf32> to vector<8x128xf32>
    %84 = math.tanh %83 : vector<8x128xf32>
    %85 = arith.mulf %81, %67 : vector<8x128xf32>
    %86 = arith.mulf %80, %84 : vector<8x128xf32>
    %87 = arith.addf %85, %86 : vector<8x128xf32>
    %88 = math.tanh %87 : vector<8x128xf32>
    %89 = arith.mulf %82, %88 : vector<8x128xf32>
    %c32 = arith.constant 32 : index
    %c0_31 = arith.constant 0 : index
    %90 = vector.load %arg10[%c32, %c0_31] : memref<64x512xf32, #tpu.memory_space<vmem>>, vector<8x512xf32>
    %c0_32 = arith.constant 0 : index
    %c0_33 = arith.constant 0 : index
    %91 = vector.load %arg3[%c0_32, %c0_33] : memref<128x512xf32, #tpu.memory_space<vmem>>, vector<128x512xf32>
    %cst_34 = arith.constant dense<0.000000e+00> : vector<8x512xf32>
    %92 = tpu.matmul %89, %91, %cst_34 {dimension_numbers = #tpu.dot_dimension_numbers<[1], [0], [0], [1], [0, 0, 1, 1], [], []>} : vector<8x128xf32>, vector<128x512xf32>, vector<8x512xf32> -> vector<8x512xf32>
    %93 = arith.addf %90, %92 : vector<8x512xf32>
    %94 = vector.extract_strided_slice %93 {offsets = [0, 0], sizes = [8, 384], strides = [1, 1]} : vector<8x512xf32> to vector<8x384xf32>
    %95 = arith.negf %94 : vector<8x384xf32>
    %96 = math.exp %95 : vector<8x384xf32>
    %cst_35 = arith.constant 1.000000e+00 : f32
    %97 = vector.broadcast %cst_35 : f32 to vector<8x384xf32>
    %98 = arith.addf %97, %96 : vector<8x384xf32>
    %99 = arith.divf %97, %98 : vector<8x384xf32>
    %100 = vector.extract_strided_slice %99 {offsets = [0, 0], sizes = [8, 128], strides = [1, 1]} : vector<8x384xf32> to vector<8x128xf32>
    %101 = vector.extract_strided_slice %99 {offsets = [0, 128], sizes = [8, 128], strides = [1, 1]} : vector<8x384xf32> to vector<8x128xf32>
    %102 = vector.extract_strided_slice %99 {offsets = [0, 256], sizes = [8, 128], strides = [1, 1]} : vector<8x384xf32> to vector<8x128xf32>
    %103 = vector.extract_strided_slice %93 {offsets = [0, 384], sizes = [8, 128], strides = [1, 1]} : vector<8x512xf32> to vector<8x128xf32>
    %104 = math.tanh %103 : vector<8x128xf32>
    %105 = arith.mulf %101, %87 : vector<8x128xf32>
    %106 = arith.mulf %100, %104 : vector<8x128xf32>
    %107 = arith.addf %105, %106 : vector<8x128xf32>
    %108 = math.tanh %107 : vector<8x128xf32>
    %109 = arith.mulf %102, %108 : vector<8x128xf32>
    %c40 = arith.constant 40 : index
    %c0_36 = arith.constant 0 : index
    %110 = vector.load %arg10[%c40, %c0_36] : memref<64x512xf32, #tpu.memory_space<vmem>>, vector<8x512xf32>
    %c0_37 = arith.constant 0 : index
    %c0_38 = arith.constant 0 : index
    %111 = vector.load %arg3[%c0_37, %c0_38] : memref<128x512xf32, #tpu.memory_space<vmem>>, vector<128x512xf32>
    %cst_39 = arith.constant dense<0.000000e+00> : vector<8x512xf32>
    %112 = tpu.matmul %109, %111, %cst_39 {dimension_numbers = #tpu.dot_dimension_numbers<[1], [0], [0], [1], [0, 0, 1, 1], [], []>} : vector<8x128xf32>, vector<128x512xf32>, vector<8x512xf32> -> vector<8x512xf32>
    %113 = arith.addf %110, %112 : vector<8x512xf32>
    %114 = vector.extract_strided_slice %113 {offsets = [0, 0], sizes = [8, 384], strides = [1, 1]} : vector<8x512xf32> to vector<8x384xf32>
    %115 = arith.negf %114 : vector<8x384xf32>
    %116 = math.exp %115 : vector<8x384xf32>
    %cst_40 = arith.constant 1.000000e+00 : f32
    %117 = vector.broadcast %cst_40 : f32 to vector<8x384xf32>
    %118 = arith.addf %117, %116 : vector<8x384xf32>
    %119 = arith.divf %117, %118 : vector<8x384xf32>
    %120 = vector.extract_strided_slice %119 {offsets = [0, 0], sizes = [8, 128], strides = [1, 1]} : vector<8x384xf32> to vector<8x128xf32>
    %121 = vector.extract_strided_slice %119 {offsets = [0, 128], sizes = [8, 128], strides = [1, 1]} : vector<8x384xf32> to vector<8x128xf32>
    %122 = vector.extract_strided_slice %119 {offsets = [0, 256], sizes = [8, 128], strides = [1, 1]} : vector<8x384xf32> to vector<8x128xf32>
    %123 = vector.extract_strided_slice %113 {offsets = [0, 384], sizes = [8, 128], strides = [1, 1]} : vector<8x512xf32> to vector<8x128xf32>
    %124 = math.tanh %123 : vector<8x128xf32>
    %125 = arith.mulf %121, %107 : vector<8x128xf32>
    %126 = arith.mulf %120, %124 : vector<8x128xf32>
    %127 = arith.addf %125, %126 : vector<8x128xf32>
    %128 = math.tanh %127 : vector<8x128xf32>
    %129 = arith.mulf %122, %128 : vector<8x128xf32>
    %c48 = arith.constant 48 : index
    %c0_41 = arith.constant 0 : index
    %130 = vector.load %arg10[%c48, %c0_41] : memref<64x512xf32, #tpu.memory_space<vmem>>, vector<8x512xf32>
    %c0_42 = arith.constant 0 : index
    %c0_43 = arith.constant 0 : index
    %131 = vector.load %arg3[%c0_42, %c0_43] : memref<128x512xf32, #tpu.memory_space<vmem>>, vector<128x512xf32>
    %cst_44 = arith.constant dense<0.000000e+00> : vector<8x512xf32>
    %132 = tpu.matmul %129, %131, %cst_44 {dimension_numbers = #tpu.dot_dimension_numbers<[1], [0], [0], [1], [0, 0, 1, 1], [], []>} : vector<8x128xf32>, vector<128x512xf32>, vector<8x512xf32> -> vector<8x512xf32>
    %133 = arith.addf %130, %132 : vector<8x512xf32>
    %134 = vector.extract_strided_slice %133 {offsets = [0, 0], sizes = [8, 384], strides = [1, 1]} : vector<8x512xf32> to vector<8x384xf32>
    %135 = arith.negf %134 : vector<8x384xf32>
    %136 = math.exp %135 : vector<8x384xf32>
    %cst_45 = arith.constant 1.000000e+00 : f32
    %137 = vector.broadcast %cst_45 : f32 to vector<8x384xf32>
    %138 = arith.addf %137, %136 : vector<8x384xf32>
    %139 = arith.divf %137, %138 : vector<8x384xf32>
    %140 = vector.extract_strided_slice %139 {offsets = [0, 0], sizes = [8, 128], strides = [1, 1]} : vector<8x384xf32> to vector<8x128xf32>
    %141 = vector.extract_strided_slice %139 {offsets = [0, 128], sizes = [8, 128], strides = [1, 1]} : vector<8x384xf32> to vector<8x128xf32>
    %142 = vector.extract_strided_slice %139 {offsets = [0, 256], sizes = [8, 128], strides = [1, 1]} : vector<8x384xf32> to vector<8x128xf32>
    %143 = vector.extract_strided_slice %133 {offsets = [0, 384], sizes = [8, 128], strides = [1, 1]} : vector<8x512xf32> to vector<8x128xf32>
    %144 = math.tanh %143 : vector<8x128xf32>
    %145 = arith.mulf %141, %127 : vector<8x128xf32>
    %146 = arith.mulf %140, %144 : vector<8x128xf32>
    %147 = arith.addf %145, %146 : vector<8x128xf32>
    %148 = math.tanh %147 : vector<8x128xf32>
    %149 = arith.mulf %142, %148 : vector<8x128xf32>
    %c56 = arith.constant 56 : index
    %c0_46 = arith.constant 0 : index
    %150 = vector.load %arg10[%c56, %c0_46] : memref<64x512xf32, #tpu.memory_space<vmem>>, vector<8x512xf32>
    %c0_47 = arith.constant 0 : index
    %c0_48 = arith.constant 0 : index
    %151 = vector.load %arg3[%c0_47, %c0_48] : memref<128x512xf32, #tpu.memory_space<vmem>>, vector<128x512xf32>
    %cst_49 = arith.constant dense<0.000000e+00> : vector<8x512xf32>
    %152 = tpu.matmul %149, %151, %cst_49 {dimension_numbers = #tpu.dot_dimension_numbers<[1], [0], [0], [1], [0, 0, 1, 1], [], []>} : vector<8x128xf32>, vector<128x512xf32>, vector<8x512xf32> -> vector<8x512xf32>
    %153 = arith.addf %150, %152 : vector<8x512xf32>
    %154 = vector.extract_strided_slice %153 {offsets = [0, 0], sizes = [8, 384], strides = [1, 1]} : vector<8x512xf32> to vector<8x384xf32>
    %155 = arith.negf %154 : vector<8x384xf32>
    %156 = math.exp %155 : vector<8x384xf32>
    %cst_50 = arith.constant 1.000000e+00 : f32
    %157 = vector.broadcast %cst_50 : f32 to vector<8x384xf32>
    %158 = arith.addf %157, %156 : vector<8x384xf32>
    %159 = arith.divf %157, %158 : vector<8x384xf32>
    %160 = vector.extract_strided_slice %159 {offsets = [0, 0], sizes = [8, 128], strides = [1, 1]} : vector<8x384xf32> to vector<8x128xf32>
    %161 = vector.extract_strided_slice %159 {offsets = [0, 128], sizes = [8, 128], strides = [1, 1]} : vector<8x384xf32> to vector<8x128xf32>
    %162 = vector.extract_strided_slice %159 {offsets = [0, 256], sizes = [8, 128], strides = [1, 1]} : vector<8x384xf32> to vector<8x128xf32>
    %163 = vector.extract_strided_slice %153 {offsets = [0, 384], sizes = [8, 128], strides = [1, 1]} : vector<8x512xf32> to vector<8x128xf32>
    %164 = math.tanh %163 : vector<8x128xf32>
    %165 = arith.mulf %161, %147 : vector<8x128xf32>
    %166 = arith.mulf %160, %164 : vector<8x128xf32>
    %167 = arith.addf %165, %166 : vector<8x128xf32>
    %168 = math.tanh %167 : vector<8x128xf32>
    %169 = arith.mulf %162, %168 : vector<8x128xf32>
    %170 = tpu.concatenate %109, %129, %149, %169 in 0 : vector<8x128xf32>, vector<8x128xf32>, vector<8x128xf32>, vector<8x128xf32> -> vector<32x128xf32>
    %c0_51 = arith.constant 0 : index
    %c0_52 = arith.constant 0 : index
    %171 = vector.load %arg5[%c0_51, %c0_52] : memref<128x128xf32, #tpu.memory_space<vmem>>, vector<128x128xf32>
    %cst_53 = arith.constant dense<0.000000e+00> : vector<32x128xf32>
    %172 = tpu.matmul %170, %171, %cst_53 {dimension_numbers = #tpu.dot_dimension_numbers<[1], [0], [0], [1], [0, 0, 1, 1], [], []>} : vector<32x128xf32>, vector<128x128xf32>, vector<32x128xf32> -> vector<32x128xf32>
    %c0_54 = arith.constant 0 : index
    %c0_55 = arith.constant 0 : index
    %173 = vector.load %arg6[%c0_54, %c0_55] : memref<1x128xf32, #tpu.memory_space<vmem>>, vector<1x128xf32>
    %174 = vector.broadcast %173 : vector<1x128xf32> to vector<32x128xf32>
    %175 = arith.addf %172, %174 : vector<32x128xf32>
    %176 = math.tanh %175 : vector<32x128xf32>
    %c0_56 = arith.constant 0 : index
    %c0_57 = arith.constant 0 : index
    %177 = vector.load %arg7[%c0_56, %c0_57] : memref<128x128xf32, #tpu.memory_space<vmem>>, vector<128x128xf32>
    %cst_58 = arith.constant dense<0.000000e+00> : vector<32x128xf32>
    %178 = tpu.matmul %176, %177, %cst_58 {dimension_numbers = #tpu.dot_dimension_numbers<[1], [0], [0], [1], [0, 0, 1, 1], [], []>} : vector<32x128xf32>, vector<128x128xf32>, vector<32x128xf32> -> vector<32x128xf32>
    %c0_59 = arith.constant 0 : index
    %c0_60 = arith.constant 0 : index
    %179 = vector.load %arg8[%c0_59, %c0_60] : memref<1x128xf32, #tpu.memory_space<vmem>>, vector<1x128xf32>
    %180 = vector.broadcast %179 : vector<1x128xf32> to vector<32x128xf32>
    %181 = arith.addf %178, %180 : vector<32x128xf32>
    %182 = arith.negf %181 : vector<32x128xf32>
    %183 = math.exp %182 : vector<32x128xf32>
    %cst_61 = arith.constant 1.000000e+00 : f32
    %184 = vector.broadcast %cst_61 : f32 to vector<32x128xf32>
    %185 = arith.addf %184, %183 : vector<32x128xf32>
    %186 = arith.divf %184, %185 : vector<32x128xf32>
    %c0_62 = arith.constant 0 : index
    %c0_63 = arith.constant 0 : index
    %c0_64 = arith.constant 0 : index
    %187 = vector.load %arg9[%c0_62, %c0_63, %c0_64] : memref<1x32x128xf32, #tpu.memory_space<vmem>>, vector<1x32x128xf32>
    %188 = vector.shape_cast %187 : vector<1x32x128xf32> to vector<32x128xf32>
    %189 = vector.shape_cast %186 : vector<32x128xf32> to vector<1x32x128xf32>
    tpu.vector_store %arg9[%c0_62, %c0_63, %c0_64], %189 {strides = array<i32>} : memref<1x32x128xf32, #tpu.memory_space<vmem>>, vector<1x32x128xf32>,
    return
  }
  func.func @transform_0(%arg0: i32) -> (i32, i32, i32) {
    %c0_i32 = arith.constant 0 : i32
    %c0_i32_0 = arith.constant 0 : i32
    %c0_i32_1 = arith.constant 0 : i32
    return %arg0, %c0_i32, %c0_i32_0 : i32, i32, i32
  }
  func.func @transform_1(%arg0: i32) -> (i32, i32) {
    %c0_i32 = arith.constant 0 : i32
    %c0_i32_0 = arith.constant 0 : i32
    %c0_i32_1 = arith.constant 0 : i32
    return %c0_i32, %c0_i32_0 : i32, i32
  }
  func.func @transform_2(%arg0: i32) -> (i32, i32) {
    %c0_i32 = arith.constant 0 : i32
    %c0_i32_0 = arith.constant 0 : i32
    %c0_i32_1 = arith.constant 0 : i32
    return %c0_i32, %c0_i32_0 : i32, i32
  }
  func.func @transform_3(%arg0: i32) -> (i32, i32) {
    %c0_i32 = arith.constant 0 : i32
    %c0_i32_0 = arith.constant 0 : i32
    %c0_i32_1 = arith.constant 0 : i32
    return %c0_i32, %c0_i32_0 : i32, i32
  }
  func.func @transform_4(%arg0: i32) -> (i32, i32) {
    %c0_i32 = arith.constant 0 : i32
    %c0_i32_0 = arith.constant 0 : i32
    %c0_i32_1 = arith.constant 0 : i32
    return %c0_i32, %c0_i32_0 : i32, i32
  }
  func.func @transform_5(%arg0: i32) -> (i32, i32) {
    %c0_i32 = arith.constant 0 : i32
    %c0_i32_0 = arith.constant 0 : i32
    %c0_i32_1 = arith.constant 0 : i32
    return %c0_i32, %c0_i32_0 : i32, i32
  }
  func.func @transform_6(%arg0: i32) -> (i32, i32) {
    %c0_i32 = arith.constant 0 : i32
    %c0_i32_0 = arith.constant 0 : i32
    %c0_i32_1 = arith.constant 0 : i32
    return %c0_i32, %c0_i32_0 : i32, i32
  }
  func.func @transform_7(%arg0: i32) -> (i32, i32) {
    %c0_i32 = arith.constant 0 : i32
    %c0_i32_0 = arith.constant 0 : i32
    %c0_i32_1 = arith.constant 0 : i32
    return %c0_i32, %c0_i32_0 : i32, i32
  }
  func.func @transform_8(%arg0: i32) -> (i32, i32, i32) {
    %c0_i32 = arith.constant 0 : i32
    %c0_i32_0 = arith.constant 0 : i32
    %c0_i32_1 = arith.constant 0 : i32
    return %arg0, %c0_i32, %c0_i32_0 : i32, i32, i32
  }
}

</mosaic_0001>

<llo_original>
// kernel: squeeze.1
$region0: #{squeeze.1}
  %s0 = inlined_call_operand.vmem [shape: f32[32], index: 0, kind: input, shape index: {}]
  %s1 = inlined_call_operand.vmem [shape: f32[1,4,8], index: 1, kind: output, shape index: {}]
  $region1: #{squeeze.1} parent=0
    #allocation0 [shape = 'u8[4096]{0}', space=vmem, size = 0x1000, scoped, tag = 'scoped mem for output reshape']
    #allocation1 [shape = 'u8[4096]{0}', space=vmem, size = 0x1000, scoped, tag = 'scoped mem for input reshape']
    %s3 = sshll.u32 1, 1
    %s4 = ssub.s32 %s3, 1
    %v5 = vld [vmem:[%s0] sm:%s4]
    %6 = vst [vmem:[#allocation1] sm:%s4] %v5
    %v7 = vld [vmem:[#allocation1] sm:$0x1]
    %vm8 = vcmask 64512
    %9 = vst.msk [vmem:[#allocation0] sm:$0x1] %vm8, %v7
    %v10 = vld [vmem:[#allocation1] sm:$0x1]
    %11 = vrot.lane.b32.xlu0 %v10, 120
    %v12 = vpop.permute.xlu0 %11
    %vm13 = vcmask 64512
    %s14 = scalar_lea.vmem [#allocation0], 1
    %15 = vst.msk [vmem:[%s14] sm:$0x1] %vm13, %v12
    %v16 = vld [vmem:[#allocation1] sm:$0x1]
    %17 = vrot.lane.b32.xlu0 %v16, 112
    %v18 = vpop.permute.xlu0 %17
    %vm19 = vcmask 64512
    %s20 = scalar_lea.vmem [#allocation0], 2
    %21 = vst.msk [vmem:[%s20] sm:$0x1] %vm19, %v18
    %v22 = vld [vmem:[#allocation1] sm:$0x1]
    %23 = vrot.lane.b32.xlu0 %v22, 104
    %v24 = vpop.permute.xlu0 %23
    %vm25 = vcmask 64512
    %s26 = scalar_lea.vmem [#allocation0], 3
    %27 = vst.msk [vmem:[%s26] sm:$0x1] %vm25, %v24
    %s29 = sshll.u32 1, 4
    %s30 = ssub.s32 %s29, 1
    %v32 = vld [vmem:[#allocation0] sm:%s30]
    %s33 = sshll.u32 1, 4
    %s34 = ssub.s32 %s33, 1
    %35 = vst [vmem:[%s1] sm:%s34] %v32

// kernel: network_forward.1
$region0: #{network_forward.1}
  #allocation0 [shape = 'u32[]', space=smem, size = 0x4, offset = 0x4, fixed_abs, tag = 'smem constant byte address 0x4 - core index']
  #allocation1 [shape = 'u32[144,128]{1,0:T(1,128)}', space=vmem, size = 0x12000, scoped, tag = 'internal scratch']
  #allocation2 [shape = 'f32[64,512]{1,0:T(8,128)}', space=vmem, size = 0x20000, scoped, tag = 'scratch operand']
  %s0 = inlined_call_operand.vmem [shape: f32[1,64,16], index: 0, kind: input, shape index: {}]
  %s1 = inlined_call_operand.hbm [shape: f32[16,512], index: 1, kind: input, shape index: {}]
  %s2 = inlined_call_operand.hbm [shape: f32[128,512], index: 2, kind: input, shape index: {}]
  %s3 = inlined_call_operand.hbm [shape: f32[1,512], index: 3, kind: input, shape index: {}]
  %s4 = inlined_call_operand.vmem [shape: f32[128,128], index: 4, kind: input, shape index: {}]
  %s5 = inlined_call_operand.vmem [shape: f32[1,128], index: 5, kind: input, shape index: {}]
  %s6 = inlined_call_operand.hbm [shape: f32[128,128], index: 6, kind: input, shape index: {}]
  %s7 = inlined_call_operand.vmem [shape: f32[1,128], index: 7, kind: input, shape index: {}]
  %s8 = inlined_call_operand.vmem [shape: f32[1,32,128], index: 8, kind: output, shape index: {}]
  %s9 = sld [smem:[#allocation0]]
  $region58: #{network_forward.1} parent=0
    _
  %s11 = ssub.s32 1, %s9
  %s12 = scalar_select 0, %s11, %s9
  $region1: #{network_forward.1} parent=0
    #allocation3 [shape = 'u8[32768]{0}', space=vmem, size = 0x8000, scoped, tag = 'input window, operand 1, single buffered']
    #allocation4 [shape = 's32[1]{0}', space=sflag, size = 0x4, scoped, tag = 'scoped memory for network_forward.1']
    #allocation5 [shape = 'u8[262144]{0}', space=vmem, size = 0x40000, scoped, tag = 'input window, operand 2, single buffered']
    #allocation6 [shape = 's32[1]{0}', space=sflag, size = 0x4, scoped, tag = 'scoped memory for network_forward.1']
    #allocation7 [shape = 'u8[2048]{0}', space=vmem, size = 0x800, scoped, tag = 'input window, operand 3, single buffered']
    #allocation8 [shape = 'u8[65536]{0}', space=vmem, size = 0x10000, scoped, tag = 'input window, operand 6, single buffered']
    #allocation9 [shape = 's32[1]{0}', space=sflag, size = 0x4, scoped, tag = 'scoped memory for network_forward.1']
    %13 = vsyncpa [#allocation4], 0
    %14 = vsyncpa [#allocation6], 0
    %15 = vsyncpa [#allocation9], 0
    // Predicated region
    $region2: #{network_forward.1} parent=1 // pred_check
      _
    $region3: #{network_forward.1} parent=1 // pred_check_branch
      %17 = sbr.rel (0) target = $region5
    $region4: #{network_forward.1} parent=1 // pred_region
      _
    $region5: #{network_forward.1} parent=1 // pred_fallthru
      _
    // Predicated region
    $region6: #{network_forward.1} parent=1 // pred_check
      _
    $region7: #{network_forward.1} parent=1 // pred_check_branch
      %19 = sbr.rel (0) target = $region9
    $region8: #{network_forward.1} parent=1 // pred_region
      %s21 = ssub.s32 1024, 1024
      %22 = vsyncadd [#allocation4], %s21
      %s23 = sshll.u32 [#allocation3], 4
      %s24 = int_to_ptr.vmem [resolvable:$true] %s23
      %29 = dma.hbm_to_vmem [thread:$0]  %s1, 1024, %s24, [#allocation4], 512, 512, 32
    $region9: #{network_forward.1} parent=1 // pred_fallthru
      _
    // Predicated region
    $region10: #{network_forward.1} parent=1 // pred_check
      _
    $region11: #{network_forward.1} parent=1 // pred_check_branch
      %31 = sbr.rel (0) target = $region13
    $region12: #{network_forward.1} parent=1 // pred_region
      %s33 = ssub.s32 8192, 8192
      %34 = vsyncadd [#allocation6], %s33
      %s35 = sshll.u32 [#allocation5], 4
      %s36 = int_to_ptr.vmem [resolvable:$true] %s35
      %41 = dma.hbm_to_vmem [thread:$0]  %s2, 8192, %s36, [#allocation6], 512, 512, 32
    $region13: #{network_forward.1} parent=1 // pred_fallthru
      _
    // Predicated region
    $region14: #{network_forward.1} parent=1 // pred_check
      _
    $region15: #{network_forward.1} parent=1 // pred_check_branch
      %43 = sbr.rel (0) target = $region17
    $region16: #{network_forward.1} parent=1 // pred_region
      %s45 = ssub.s32 64, 64
      %46 = vsyncadd [#allocation6], %s45
      %s48 = sshll.u32 [#allocation7], 4
      %s49 = int_to_ptr.vmem [resolvable:$true] %s48
      %51 = dma.hbm_to_vmem [thread:$0]  %s3, 64, %s49, [#allocation6]
    $region17: #{network_forward.1} parent=1 // pred_fallthru
      _
    // Predicated region
    $region18: #{network_forward.1} parent=1 // pred_check
      _
    $region19: #{network_forward.1} parent=1 // pred_check_branch
      %53 = sbr.rel (0) target = $region21
    $region20: #{network_forward.1} parent=1 // pred_region
      _
    $region21: #{network_forward.1} parent=1 // pred_fallthru
      _
    // Predicated region
    $region22: #{network_forward.1} parent=1 // pred_check
      _
    $region23: #{network_forward.1} parent=1 // pred_check_branch
      %55 = sbr.rel (0) target = $region25
    $region24: #{network_forward.1} parent=1 // pred_region
      _
    $region25: #{network_forward.1} parent=1 // pred_fallthru
      _
    // Predicated region
    $region26: #{network_forward.1} parent=1 // pred_check
      _
    $region27: #{network_forward.1} parent=1 // pred_check_branch
      %57 = sbr.rel (0) target = $region29
    $region28: #{network_forward.1} parent=1 // pred_region
      %s59 = ssub.s32 2048, 2048
      %60 = vsyncadd [#allocation9], %s59
      %s61 = sshll.u32 [#allocation8], 4
      %s62 = int_to_ptr.vmem [resolvable:$true] %s61
      %67 = dma.hbm_to_vmem [thread:$0]  %s6, 2048, %s62, [#allocation9], 128, 128, 8
    $region29: #{network_forward.1} parent=1 // pred_fallthru
      _
    // Predicated region
    $region30: #{network_forward.1} parent=1 // pred_check
      _
    $region31: #{network_forward.1} parent=1 // pred_check_branch
      %69 = sbr.rel (0) target = $region33
    $region32: #{network_forward.1} parent=1 // pred_region
      _
    $region33: #{network_forward.1} parent=1 // pred_fallthru
      _
    // Predicated region
    $region34: #{network_forward.1} parent=1 // pred_check
      _
    $region35: #{network_forward.1} parent=1 // pred_check_branch
      %71 = sbr.rel (0) target = $region37
    $region36: #{network_forward.1} parent=1 // pred_region
      %72 = dma.done [#allocation4], 1024
    $region37: #{network_forward.1} parent=1 // pred_fallthru
      _
    // Predicated region
    $region38: #{network_forward.1} parent=1 // pred_check
      _
    $region39: #{network_forward.1} parent=1 // pred_check_branch
      %74 = sbr.rel (0) target = $region41
    $region40: #{network_forward.1} parent=1 // pred_region
      %75 = dma.done [#allocation6], 8192
    $region41: #{network_forward.1} parent=1 // pred_fallthru
      _
    // Predicated region
    $region42: #{network_forward.1} parent=1 // pred_check
      _
    $region43: #{network_forward.1} parent=1 // pred_check_branch
      %77 = sbr.rel (0) target = $region45
    $region44: #{network_forward.1} parent=1 // pred_region
      %78 = dma.done [#allocation6], 64
    $region45: #{network_forward.1} parent=1 // pred_fallthru
      _
    // Predicated region
    $region46: #{network_forward.1} parent=1 // pred_check
      _
    $region47: #{network_forward.1} parent=1 // pred_check_branch
      %80 = sbr.rel (0) target = $region49
    $region48: #{network_forward.1} parent=1 // pred_region
      %81 = dma.done [#allocation9], 2048
    $region49: #{network_forward.1} parent=1 // pred_fallthru
      _
    %v82 = vld [vmem:[%s0] sm:$0xff]
    %v83 = vld [vmem:[%s0 + $0x8] sm:$0xff]
    %v84 = vld [vmem:[%s0 + $0x10] sm:$0xff]
    %v85 = vld [vmem:[%s0 + $0x18] sm:$0xff]
    %v86 = vld [vmem:[%s0 + $0x20] sm:$0xff]
    %v87 = vld [vmem:[%s0 + $0x28] sm:$0xff]
    %v88 = vld [vmem:[%s0 + $0x30] sm:$0xff]
    %v89 = vld [vmem:[%s0 + $0x38] sm:$0xff]
    %v90 = vld [vmem:[#allocation3] sm:$0xff]
    %v91 = vld [vmem:[#allocation3 + $0x8] sm:$0xff]
    %v92 = vld [vmem:[#allocation3 + $0x10] sm:$0xff]
    %v93 = vld [vmem:[#allocation3 + $0x18] sm:$0xff]
    %v94 = vld [vmem:[#allocation3 + $0x20] sm:$0xff]
    %v95 = vld [vmem:[#allocation3 + $0x28] sm:$0xff]
    %v96 = vld [vmem:[#allocation3 + $0x30] sm:$0xff]
    %v97 = vld [vmem:[#allocation3 + $0x38] sm:$0xff]
    %v98 = vld [vmem:[#allocation7] sm:$0xf]
    %v100 = vlaneseq
    %v101 = vshrl.u32 %v100, 7
    %v102 = vsub.s32 0, %v101
    %v103 = vrot.slane %v98, %v102
    %v104 = vlaneseq
    %v105 = vshrl.u32 %v104, 7
    %v106 = vsub.s32 1, %v105
    %v107 = vrot.slane %v98, %v106
    %v108 = vlaneseq
    %v109 = vshrl.u32 %v108, 7
    %v110 = vsub.s32 2, %v109
    %v111 = vrot.slane %v98, %v110
    %v112 = vlaneseq
    %v113 = vshrl.u32 %v112, 7
    %v114 = vsub.s32 3, %v113
    %v115 = vrot.slane %v98, %v114
    %vm120 = vcmask 130048
    %v122 = vsel %vm120, %v82, 0
    %v125 = vsel %vm120, %v83, 0
    %v128 = vsel %vm120, %v84, 0
    %v131 = vsel %vm120, %v85, 0
    %v134 = vsel %vm120, %v86, 0
    %v137 = vsel %vm120, %v87, 0
    %v140 = vsel %vm120, %v88, 0
    %v143 = vsel %vm120, %v89, 0
    %145 = vmatprep.subr.mxu0 0.0
    %146 = vmatpush1.msra.mxu0 0.0
    %147 = vmatprep.subr.mxu0 0.0
    %148 = vmatpush1.msra.mxu0 0.0
    %149 = vmatprep.subr.mxu0 0.0
    %150 = vmatpush1.msra.mxu0 0.0
    %151 = vmatprep.subr.mxu0 0.0
    %152 = vmatpush1.msra.mxu0 0.0
    %153 = vmatprep.subr.mxu0 0.0
    %154 = vmatpush1.msra.mxu0 0.0
    %155 = vmatprep.subr.mxu0 0.0
    %156 = vmatpush1.msra.mxu0 0.0
    %157 = vmatprep.subr.mxu0 0.0
    %158 = vmatpush1.msra.mxu0 0.0
    %159 = vmatprep.subr.mxu0 0.0
    %160 = vmatpush1.msra.mxu0 0.0
    %161 = vmatprep.subr.mxu0 0.0
    %162 = vmatpush1.msra.mxu0 0.0
    %163 = vmatprep.subr.mxu0 0.0
    %164 = vmatpush1.msra.mxu0 0.0
    %165 = vmatprep.subr.mxu0 0.0
    %166 = vmatpush1.msra.mxu0 0.0
    %167 = vmatprep.subr.mxu0 0.0
    %168 = vmatpush1.msra.mxu0 0.0
    %169 = vmatprep.subr.mxu0 0.0
    %170 = vmatpush1.msra.mxu0 0.0
    %171 = vmatprep.subr.mxu0 0.0
    %172 = vmatpush1.msra.mxu0 0.0
    %173 = vmatprep.subr.mxu0 %v95
    %174 = vmatpush1.msra.mxu0 %v94
    %175 = vmatprep.subr.mxu0 %v91
    %176 = vmatpush1.msra.mxu0 %v90
    %177 = vmatprep.subr.mxu0 0.0
    %178 = vmatpush2.msra.mxu0 0.0
    %179 = vmatprep.subr.mxu0 0.0
    %180 = vmatpush2.msra.mxu0 0.0
    %181 = vmatprep.subr.mxu0 0.0
    %182 = vmatpush2.msra.mxu0 0.0
    %183 = vmatprep.subr.mxu0 0.0
    %184 = vmatpush2.msra.mxu0 0.0
    %185 = vmatprep.subr.mxu0 0.0
    %186 = vmatpush2.msra.mxu0 0.0
    %187 = vmatprep.subr.mxu0 0.0
    %188 = vmatpush2.msra.mxu0 0.0
    %189 = vmatprep.subr.mxu0 0.0
    %190 = vmatpush2.msra.mxu0 0.0
    %191 = vmatprep.subr.mxu0 0.0
    %192 = vmatpush2.msra.mxu0 0.0
    %193 = vmatprep.subr.mxu0 0.0
    %194 = vmatpush2.msra.mxu0 0.0
    %195 = vmatprep.subr.mxu0 0.0
    %196 = vmatpush2.msra.mxu0 0.0
    %197 = vmatprep.subr.mxu0 0.0
    %198 = vmatpush2.msra.mxu0 0.0
    %199 = vmatprep.subr.mxu0 0.0
    %200 = vmatpush2.msra.mxu0 0.0
    %201 = vmatprep.subr.mxu0 0.0
    %202 = vmatpush2.msra.mxu0 0.0
    %203 = vmatprep.subr.mxu0 0.0
    %204 = vmatpush2.msra.mxu0 0.0
    %205 = vmatprep.subr.mxu0 0.0
    %206 = vmatpush2.msra.mxu0 0.0
    %207 = vmatprep.subr.mxu0 0.0
    %208 = vmatpush2.msra.mxu0 0.0
    %209 = vmatprep.mubr.f32.mxu0 0.0
    %210 = vmatmul.mubr.f32.gmra.mxu0 %v122
    %v211 = vpop.f32.mrf.mxu0
    %v212 = vadd.f32 %v103, %v211
    %v213 = vpop.f32.mrf.mxu0
    %v214 = vadd.f32 %v107, %v213
    %215 = vmatprep.mubr.f32.mxu0 0.0
    %216 = vmatmul.mubr.f32.gmra.mxu0 %v125
    %v217 = vpop.f32.mrf.mxu0
    %v218 = vadd.f32 %v103, %v217
    %v219 = vpop.f32.mrf.mxu0
    %v220 = vadd.f32 %v107, %v219
    %221 = vmatprep.mubr.f32.mxu0 0.0
    %222 = vmatmul.mubr.f32.gmra.mxu0 %v128
    %v223 = vpop.f32.mrf.mxu0
    %v224 = vadd.f32 %v103, %v223
    %v225 = vpop.f32.mrf.mxu0
    %v226 = vadd.f32 %v107, %v225
    %227 = vmatprep.mubr.f32.mxu0 0.0
    %228 = vmatmul.mubr.f32.gmra.mxu0 %v131
    %v229 = vpop.f32.mrf.mxu0
    %v230 = vadd.f32 %v103, %v229
    %v231 = vpop.f32.mrf.mxu0
    %v232 = vadd.f32 %v107, %v231
    %233 = vmatprep.mubr.f32.mxu0 0.0
    %234 = vmatmul.mubr.f32.gmra.mxu0 %v134
    %v235 = vpop.f32.mrf.mxu0
    %v236 = vadd.f32 %v103, %v235
    %v237 = vpop.f32.mrf.mxu0
    %v238 = vadd.f32 %v107, %v237
    %239 = vmatprep.mubr.f32.mxu0 0.0
    %240 = vmatmul.mubr.f32.gmra.mxu0 %v137
    %v241 = vpop.f32.mrf.mxu0
    %v242 = vadd.f32 %v103, %v241
    %v243 = vpop.f32.mrf.mxu0
    %v244 = vadd.f32 %v107, %v243
    %245 = vmatprep.mubr.f32.mxu0 0.0
    %246 = vmatmul.mubr.f32.gmra.mxu0 %v140
    %v247 = vpop.f32.mrf.mxu0
    %v248 = vadd.f32 %v103, %v247
    %v249 = vpop.f32.mrf.mxu0
    %v250 = vadd.f32 %v107, %v249
    %251 = vmatprep.mubr.f32.mxu0 0.0
    %252 = vmatmul.mubr.f32.gmra.mxu0 %v143
    %v253 = vpop.f32.mrf.mxu0
    %v254 = vadd.f32 %v103, %v253
    %v255 = vpop.f32.mrf.mxu0
    %v256 = vadd.f32 %v107, %v255
    %257 = vdwg.mxu0
    %258 = vmatprep.subr.mxu0 0.0
    %259 = vmatpush1.msra.mxu0 0.0
    %260 = vmatprep.subr.mxu0 0.0
    %261 = vmatpush1.msra.mxu0 0.0
    %262 = vmatprep.subr.mxu0 0.0
    %263 = vmatpush1.msra.mxu0 0.0
    %264 = vmatprep.subr.mxu0 0.0
    %265 = vmatpush1.msra.mxu0 0.0
    %266 = vmatprep.subr.mxu0 0.0
    %267 = vmatpush1.msra.mxu0 0.0
    %268 = vmatprep.subr.mxu0 0.0
    %269 = vmatpush1.msra.mxu0 0.0
    %270 = vmatprep.subr.mxu0 0.0
    %271 = vmatpush1.msra.mxu0 0.0
    %272 = vmatprep.subr.mxu0 0.0
    %273 = vmatpush1.msra.mxu0 0.0
    %274 = vmatprep.subr.mxu0 0.0
    %275 = vmatpush1.msra.mxu0 0.0
    %276 = vmatprep.subr.mxu0 0.0
    %277 = vmatpush1.msra.mxu0 0.0
    %278 = vmatprep.subr.mxu0 0.0
    %279 = vmatpush1.msra.mxu0 0.0
    %280 = vmatprep.subr.mxu0 0.0
    %281 = vmatpush1.msra.mxu0 0.0
    %282 = vmatprep.subr.mxu0 0.0
    %283 = vmatpush1.msra.mxu0 0.0
    %284 = vmatprep.subr.mxu0 0.0
    %285 = vmatpush1.msra.mxu0 0.0
    %286 = vmatprep.subr.mxu0 %v97
    %287 = vmatpush1.msra.mxu0 %v96
    %288 = vmatprep.subr.mxu0 %v93
    %289 = vmatpush1.msra.mxu0 %v92
    %290 = vmatprep.subr.mxu0 0.0
    %291 = vmatpush2.msra.mxu0 0.0
    %292 = vmatprep.subr.mxu0 0.0
    %293 = vmatpush2.msra.mxu0 0.0
    %294 = vmatprep.subr.mxu0 0.0
    %295 = vmatpush2.msra.mxu0 0.0
    %296 = vmatprep.subr.mxu0 0.0
    %297 = vmatpush2.msra.mxu0 0.0
    %298 = vmatprep.subr.mxu0 0.0
    %299 = vmatpush2.msra.mxu0 0.0
    %300 = vmatprep.subr.mxu0 0.0
    %301 = vmatpush2.msra.mxu0 0.0
    %302 = vmatprep.subr.mxu0 0.0
    %303 = vmatpush2.msra.mxu0 0.0
    %304 = vmatprep.subr.mxu0 0.0
    %305 = vmatpush2.msra.mxu0 0.0
    %306 = vmatprep.subr.mxu0 0.0
    %307 = vmatpush2.msra.mxu0 0.0
    %308 = vmatprep.subr.mxu0 0.0
    %309 = vmatpush2.msra.mxu0 0.0
    %310 = vmatprep.subr.mxu0 0.0
    %311 = vmatpush2.msra.mxu0 0.0
    %312 = vmatprep.subr.mxu0 0.0
    %313 = vmatpush2.msra.mxu0 0.0
    %314 = vmatprep.subr.mxu0 0.0
    %315 = vmatpush2.msra.mxu0 0.0
    %316 = vmatprep.subr.mxu0 0.0
    %317 = vmatpush2.msra.mxu0 0.0
    %318 = vmatprep.subr.mxu0 0.0
    %319 = vmatpush2.msra.mxu0 0.0
    %320 = vmatprep.subr.mxu0 0.0
    %321 = vmatpush2.msra.mxu0 0.0
    %322 = vmatprep.mubr.f32.mxu0 0.0
    %323 = vmatmul.mubr.f32.gmra.mxu0 %v122
    %v324 = vpop.f32.mrf.mxu0
    %v325 = vadd.f32 %v111, %v324
    %v326 = vpop.f32.mrf.mxu0
    %v327 = vadd.f32 %v115, %v326
    %328 = vmatprep.mubr.f32.mxu0 0.0
    %329 = vmatmul.mubr.f32.gmra.mxu0 %v125
    %v330 = vpop.f32.mrf.mxu0
    %v331 = vadd.f32 %v111, %v330
    %v332 = vpop.f32.mrf.mxu0
    %v333 = vadd.f32 %v115, %v332
    %334 = vmatprep.mubr.f32.mxu0 0.0
    %335 = vmatmul.mubr.f32.gmra.mxu0 %v128
    %v336 = vpop.f32.mrf.mxu0
    %v337 = vadd.f32 %v111, %v336
    %v338 = vpop.f32.mrf.mxu0
    %v339 = vadd.f32 %v115, %v338
    %340 = vmatprep.mubr.f32.mxu0 0.0
    %341 = vmatmul.mubr.f32.gmra.mxu0 %v131
    %v342 = vpop.f32.mrf.mxu0
    %v343 = vadd.f32 %v111, %v342
    %v344 = vpop.f32.mrf.mxu0
    %v345 = vadd.f32 %v115, %v344
    %346 = vmatprep.mubr.f32.mxu0 0.0
    %347 = vmatmul.mubr.f32.gmra.mxu0 %v134
    %v348 = vpop.f32.mrf.mxu0
    %v349 = vadd.f32 %v111, %v348
    %v350 = vpop.f32.mrf.mxu0
    %v351 = vadd.f32 %v115, %v350
    %352 = vmatprep.mubr.f32.mxu0 0.0
    %353 = vmatmul.mubr.f32.gmra.mxu0 %v137
    %v354 = vpop.f32.mrf.mxu0
    %v355 = vadd.f32 %v111, %v354
    %v356 = vpop.f32.mrf.mxu0
    %v357 = vadd.f32 %v115, %v356
    %358 = vmatprep.mubr.f32.mxu0 0.0
    %359 = vmatmul.mubr.f32.gmra.mxu0 %v140
    %v360 = vpop.f32.mrf.mxu0
    %v361 = vadd.f32 %v111, %v360
    %v362 = vpop.f32.mrf.mxu0
    %v363 = vadd.f32 %v115, %v362
    %364 = vmatprep.mubr.f32.mxu0 0.0
    %365 = vmatmul.mubr.f32.gmra.mxu0 %v143
    %v366 = vpop.f32.mrf.mxu0
    %v367 = vadd.f32 %v111, %v366
    %v368 = vpop.f32.mrf.mxu0
    %v369 = vadd.f32 %v115, %v368
    %370 = vdwg.mxu0
    %371 = vst [vmem:[#allocation2] sm:$0xff] %v212
    %372 = vst [vmem:[#allocation2 + $0x8] sm:$0xff] %v214
    %373 = vst [vmem:[#allocation2 + $0x10] sm:$0xff] %v325
    %374 = vst [vmem:[#allocation2 + $0x18] sm:$0xff] %v327
    %375 = vst [vmem:[#allocation2 + $0x20] sm:$0xff] %v218
    %376 = vst [vmem:[#allocation2 + $0x28] sm:$0xff] %v220
    %377 = vst [vmem:[#allocation2 + $0x30] sm:$0xff] %v331
    %378 = vst [vmem:[#allocation2 + $0x38] sm:$0xff] %v333
    %379 = vst [vmem:[#allocation2 + $0x40] sm:$0xff] %v224
    %380 = vst [vmem:[#allocation2 + $0x48] sm:$0xff] %v226
    %381 = vst [vmem:[#allocation2 + $0x50] sm:$0xff] %v337
    %382 = vst [vmem:[#allocation2 + $0x58] sm:$0xff] %v339
    %383 = vst [vmem:[#allocation2 + $0x60] sm:$0xff] %v230
    %384 = vst [vmem:[#allocation2 + $0x68] sm:$0xff] %v232
    %385 = vst [vmem:[#allocation2 + $0x70] sm:$0xff] %v343
    %386 = vst [vmem:[#allocation2 + $0x78] sm:$0xff] %v345
    %387 = vst [vmem:[#allocation2 + $0x80] sm:$0xff] %v236
    %388 = vst [vmem:[#allocation2 + $0x88] sm:$0xff] %v238
    %389 = vst [vmem:[#allocation2 + $0x90] sm:$0xff] %v349
    %390 = vst [vmem:[#allocation2 + $0x98] sm:$0xff] %v351
    %391 = vst [vmem:[#allocation2 + $0xa0] sm:$0xff] %v242
    %392 = vst [vmem:[#allocation2 + $0xa8] sm:$0xff] %v244
    %393 = vst [vmem:[#allocation2 + $0xb0] sm:$0xff] %v355
    %394 = vst [vmem:[#allocation2 + $0xb8] sm:$0xff] %v357
    %395 = vst [vmem:[#allocation2 + $0xc0] sm:$0xff] %v248
    %396 = vst [vmem:[#allocation2 + $0xc8] sm:$0xff] %v250
    %397 = vst [vmem:[#allocation2 + $0xd0] sm:$0xff] %v361
    %398 = vst [vmem:[#allocation2 + $0xd8] sm:$0xff] %v363
    %399 = vst [vmem:[#allocation2 + $0xe0] sm:$0xff] %v254
    %400 = vst [vmem:[#allocation2 + $0xe8] sm:$0xff] %v256
    %401 = vst [vmem:[#allocation2 + $0xf0] sm:$0xff] %v367
    %402 = vst [vmem:[#allocation2 + $0xf8] sm:$0xff] %v369
    %v403 = vld [vmem:[#allocation2] sm:$0xff]
    %v404 = vld [vmem:[#allocation2 + $0x8] sm:$0xff]
    %v405 = vld [vmem:[#allocation2 + $0x10] sm:$0xff]
    %v406 = vld [vmem:[#allocation2 + $0x18] sm:$0xff]
    %v407 = vld [vmem:[#allocation5] sm:$0xff]
    %v408 = vld [vmem:[#allocation5 + $0x8] sm:$0xff]
    %v409 = vld [vmem:[#allocation5 + $0x10] sm:$0xff]
    %v410 = vld [vmem:[#allocation5 + $0x18] sm:$0xff]
    %v411 = vld [vmem:[#allocation5 + $0x20] sm:$0xff]
    %v412 = vld [vmem:[#allocation5 + $0x28] sm:$0xff]
    %v413 = vld [vmem:[#allocation5 + $0x30] sm:$0xff]
    %v414 = vld [vmem:[#allocation5 + $0x38] sm:$0xff]
    %v415 = vld [vmem:[#allocation5 + $0x40] sm:$0xff]
    %v416 = vld [vmem:[#allocation5 + $0x48] sm:$0xff]
    %v417 = vld [vmem:[#allocation5 + $0x50] sm:$0xff]
    %v418 = vld [vmem:[#allocation5 + $0x58] sm:$0xff]
    %v419 = vld [vmem:[#allocation5 + $0x60] sm:$0xff]
    %v420 = vld [vmem:[#allocation5 + $0x68] sm:$0xff]
    %v421 = vld [vmem:[#allocation5 + $0x70] sm:$0xff]
    %v422 = vld [vmem:[#allocation5 + $0x78] sm:$0xff]
    %v423 = vld [vmem:[#allocation5 + $0x80] sm:$0xff]
    %v424 = vld [vmem:[#allocation5 + $0x88] sm:$0xff]
    %v425 = vld [vmem:[#allocation5 + $0x90] sm:$0xff]
    %v426 = vld [vmem:[#allocation5 + $0x98] sm:$0xff]
    %v427 = vld [vmem:[#allocation5 + $0xa0] sm:$0xff]
    %v428 = vld [vmem:[#allocation5 + $0xa8] sm:$0xff]
    %v429 = vld [vmem:[#allocation5 + $0xb0] sm:$0xff]
    %v430 = vld [vmem:[#allocation5 + $0xb8] sm:$0xff]
    %v431 = vld [vmem:[#allocation5 + $0xc0] sm:$0xff]
    %v432 = vld [vmem:[#allocation5 + $0xc8] sm:$0xff]
    %v433 = vld [vmem:[#allocation5 + $0xd0] sm:$0xff]
    %v434 = vld [vmem:[#allocation5 + $0xd8] sm:$0xff]
    %v435 = vld [vmem:[#allocation5 + $0xe0] sm:$0xff]
    %v436 = vld [vmem:[#allocation5 + $0xe8] sm:$0xff]
    %v437 = vld [vmem:[#allocation5 + $0xf0] sm:$0xff]
    %v438 = vld [vmem:[#allocation5 + $0xf8] sm:$0xff]
    %v439 = vld [vmem:[#allocation5 + $0x100] sm:$0xff]
    %v440 = vld [vmem:[#allocation5 + $0x108] sm:$0xff]
    %v441 = vld [vmem:[#allocation5 + $0x110] sm:$0xff]
    %v442 = vld [vmem:[#allocation5 + $0x118] sm:$0xff]
    %v443 = vld [vmem:[#allocation5 + $0x120] sm:$0xff]
    %v444 = vld [vmem:[#allocation5 + $0x128] sm:$0xff]
    %v445 = vld [vmem:[#allocation5 + $0x130] sm:$0xff]
    %v446 = vld [vmem:[#allocation5 + $0x138] sm:$0xff]
    %v447 = vld [vmem:[#allocation5 + $0x140] sm:$0xff]
    %v448 = vld [vmem:[#allocation5 + $0x148] sm:$0xff]
    %v449 = vld [vmem:[#allocation5 + $0x150] sm:$0xff]
    %v450 = vld [vmem:[#allocation5 + $0x158] sm:$0xff]
    %v451 = vld [vmem:[#allocation5 + $0x160] sm:$0xff]
    %v452 = vld [vmem:[#allocation5 + $0x168] sm:$0xff]
    %v453 = vld [vmem:[#allocation5 + $0x170] sm:$0xff]
    %v454 = vld [vmem:[#allocation5 + $0x178] sm:$0xff]
    %v455 = vld [vmem:[#allocation5 + $0x180] sm:$0xff]
    %v456 = vld [vmem:[#allocation5 + $0x188] sm:$0xff]
    %v457 = vld [vmem:[#allocation5 + $0x190] sm:$0xff]
    %v458 = vld [vmem:[#allocation5 + $0x198] sm:$0xff]
    %v459 = vld [vmem:[#allocation5 + $0x1a0] sm:$0xff]
    %v460 = vld [vmem:[#allocation5 + $0x1a8] sm:$0xff]
    %v461 = vld [vmem:[#allocation5 + $0x1b0] sm:$0xff]
    %v462 = vld [vmem:[#allocation5 + $0x1b8] sm:$0xff]
    %v463 = vld [vmem:[#allocation5 + $0x1c0] sm:$0xff]
    %v464 = vld [vmem:[#allocation5 + $0x1c8] sm:$0xff]
    %v465 = vld [vmem:[#allocation5 + $0x1d0] sm:$0xff]
    %v466 = vld [vmem:[#allocation5 + $0x1d8] sm:$0xff]
    %v467 = vld [vmem:[#allocation5 + $0x1e0] sm:$0xff]
    %v468 = vld [vmem:[#allocation5 + $0x1e8] sm:$0xff]
    %v469 = vld [vmem:[#allocation5 + $0x1f0] sm:$0xff]
    %v470 = vld [vmem:[#allocation5 + $0x1f8] sm:$0xff]
    %471 = vmatprep.subr.mxu0 %v468
    %472 = vmatpush1.msra.mxu0 %v467
    %473 = vmatprep.subr.mxu0 %v464
    %474 = vmatpush1.msra.mxu0 %v463
    %475 = vmatprep.subr.mxu0 %v460
    %476 = vmatpush1.msra.mxu0 %v459
    %477 = vmatprep.subr.mxu0 %v456
    %478 = vmatpush1.msra.mxu0 %v455
    %479 = vmatprep.subr.mxu0 %v452
    %480 = vmatpush1.msra.mxu0 %v451
    %481 = vmatprep.subr.mxu0 %v448
    %482 = vmatpush1.msra.mxu0 %v447
    %483 = vmatprep.subr.mxu0 %v444
    %484 = vmatpush1.msra.mxu0 %v443
    %485 = vmatprep.subr.mxu0 %v440
    %486 = vmatpush1.msra.mxu0 %v439
    %487 = vmatprep.subr.mxu0 %v436
    %488 = vmatpush1.msra.mxu0 %v435
    %489 = vmatprep.subr.mxu0 %v432
    %490 = vmatpush1.msra.mxu0 %v431
    %491 = vmatprep.subr.mxu0 %v428
    %492 = vmatpush1.msra.mxu0 %v427
    %493 = vmatprep.subr.mxu0 %v424
    %494 = vmatpush1.msra.mxu0 %v423
    %495 = vmatprep.subr.mxu0 %v420
    %496 = vmatpush1.msra.mxu0 %v419
    %497 = vmatprep.subr.mxu0 %v416
    %498 = vmatpush1.msra.mxu0 %v415
    %499 = vmatprep.subr.mxu0 %v412
    %500 = vmatpush1.msra.mxu0 %v411
    %501 = vmatprep.subr.mxu0 %v408
    %502 = vmatpush1.msra.mxu0 %v407
    %503 = vmatprep.subr.mxu0 0.0
    %504 = vmatpush2.msra.mxu0 0.0
    %505 = vmatprep.subr.mxu0 0.0
    %506 = vmatpush2.msra.mxu0 0.0
    %507 = vmatprep.subr.mxu0 0.0
    %508 = vmatpush2.msra.mxu0 0.0
    %509 = vmatprep.subr.mxu0 0.0
    %510 = vmatpush2.msra.mxu0 0.0
    %511 = vmatprep.subr.mxu0 0.0
    %512 = vmatpush2.msra.mxu0 0.0
    %513 = vmatprep.subr.mxu0 0.0
    %514 = vmatpush2.msra.mxu0 0.0
    %515 = vmatprep.subr.mxu0 0.0
    %516 = vmatpush2.msra.mxu0 0.0
    %517 = vmatprep.subr.mxu0 0.0
    %518 = vmatpush2.msra.mxu0 0.0
    %519 = vmatprep.subr.mxu0 0.0
    %520 = vmatpush2.msra.mxu0 0.0
    %521 = vmatprep.subr.mxu0 0.0
    %522 = vmatpush2.msra.mxu0 0.0
    %523 = vmatprep.subr.mxu0 0.0
    %524 = vmatpush2.msra.mxu0 0.0
    %525 = vmatprep.subr.mxu0 0.0
    %526 = vmatpush2.msra.mxu0 0.0
    %527 = vmatprep.subr.mxu0 0.0
    %528 = vmatpush2.msra.mxu0 0.0
    %529 = vmatprep.subr.mxu0 0.0
    %530 = vmatpush2.msra.mxu0 0.0
    %531 = vmatprep.subr.mxu0 0.0
    %532 = vmatpush2.msra.mxu0 0.0
    %533 = vmatprep.subr.mxu0 0.0
    %534 = vmatpush2.msra.mxu0 0.0
    %535 = vmatprep.mubr.f32.mxu0 0.0
    %536 = vmatmul.mubr.f32.gmra.mxu0 0.0
    %v537 = vpop.f32.mrf.mxu0
    %v538 = vadd.f32 0.0, %v537
    %v539 = vpop.f32.mrf.mxu0
    %v540 = vadd.f32 0.0, %v539
    %541 = vdwg.mxu0
    %542 = vmatprep.subr.mxu0 %v470
    %543 = vmatpush1.msra.mxu0 %v469
    %544 = vmatprep.subr.mxu0 %v466
    %545 = vmatpush1.msra.mxu0 %v465
    %546 = vmatprep.subr.mxu0 %v462
    %547 = vmatpush1.msra.mxu0 %v461
    %548 = vmatprep.subr.mxu0 %v458
    %549 = vmatpush1.msra.mxu0 %v457
    %550 = vmatprep.subr.mxu0 %v454
    %551 = vmatpush1.msra.mxu0 %v453
    %552 = vmatprep.subr.mxu0 %v450
    %553 = vmatpush1.msra.mxu0 %v449
    %554 = vmatprep.subr.mxu0 %v446
    %555 = vmatpush1.msra.mxu0 %v445
    %556 = vmatprep.subr.mxu0 %v442
    %557 = vmatpush1.msra.mxu0 %v441
    %558 = vmatprep.subr.mxu0 %v438
    %559 = vmatpush1.msra.mxu0 %v437
    %560 = vmatprep.subr.mxu0 %v434
    %561 = vmatpush1.msra.mxu0 %v433
    %562 = vmatprep.subr.mxu0 %v430
    %563 = vmatpush1.msra.mxu0 %v429
    %564 = vmatprep.subr.mxu0 %v426
    %565 = vmatpush1.msra.mxu0 %v425
    %566 = vmatprep.subr.mxu0 %v422
    %567 = vmatpush1.msra.mxu0 %v421
    %568 = vmatprep.subr.mxu0 %v418
    %569 = vmatpush1.msra.mxu0 %v417
    %570 = vmatprep.subr.mxu0 %v414
    %571 = vmatpush1.msra.mxu0 %v413
    %572 = vmatprep.subr.mxu0 %v410
    %573 = vmatpush1.msra.mxu0 %v409
    %574 = vmatprep.subr.mxu0 0.0
    %575 = vmatpush2.msra.mxu0 0.0
    %576 = vmatprep.subr.mxu0 0.0
    %577 = vmatpush2.msra.mxu0 0.0
    %578 = vmatprep.subr.mxu0 0.0
    %579 = vmatpush2.msra.mxu0 0.0
    %580 = vmatprep.subr.mxu0 0.0
    %581 = vmatpush2.msra.mxu0 0.0
    %582 = vmatprep.subr.mxu0 0.0
    %583 = vmatpush2.msra.mxu0 0.0
    %584 = vmatprep.subr.mxu0 0.0
    %585 = vmatpush2.msra.mxu0 0.0
    %586 = vmatprep.subr.mxu0 0.0
    %587 = vmatpush2.msra.mxu0 0.0
    %588 = vmatprep.subr.mxu0 0.0
    %589 = vmatpush2.msra.mxu0 0.0
    %590 = vmatprep.subr.mxu0 0.0
    %591 = vmatpush2.msra.mxu0 0.0
    %592 = vmatprep.subr.mxu0 0.0
    %593 = vmatpush2.msra.mxu0 0.0
    %594 = vmatprep.subr.mxu0 0.0
    %595 = vmatpush2.msra.mxu0 0.0
    %596 = vmatprep.subr.mxu0 0.0
    %597 = vmatpush2.msra.mxu0 0.0
    %598 = vmatprep.subr.mxu0 0.0
    %599 = vmatpush2.msra.mxu0 0.0
    %600 = vmatprep.subr.mxu0 0.0
    %601 = vmatpush2.msra.mxu0 0.0
    %602 = vmatprep.subr.mxu0 0.0
    %603 = vmatpush2.msra.mxu0 0.0
    %604 = vmatprep.subr.mxu0 0.0
    %605 = vmatpush2.msra.mxu0 0.0
    %606 = vmatprep.mubr.f32.mxu0 0.0
    %607 = vmatmul.mubr.f32.gmra.mxu0 0.0
    %v608 = vpop.f32.mrf.mxu0
    %v609 = vadd.f32 0.0, %v608
    %v610 = vpop.f32.mrf.mxu0
    %v611 = vadd.f32 0.0, %v610
    %612 = vdwg.mxu0
    %v613 = vadd.f32 %v403, %v538
    %v614 = vadd.f32 %v404, %v540
    %v615 = vadd.f32 %v405, %v609
    %v616 = vadd.f32 %v406, %v611
    %v617 = vxor.u32 %v613, 2147483648
    %v618 = vxor.u32 %v614, 2147483648
    %v619 = vxor.u32 %v615, 2147483648
    %v620 = vmul.f32 %v617, 1.442695
    %v621 = vpow.pop %v620
    %v622 = vmul.f32 %v618, 1.442695
    %v623 = vpow.pop %v622
    %v624 = vmul.f32 %v619, 1.442695
    %v625 = vpow.pop %v624
    %v626 = vadd.f32 %v621, 1.0
    %v627 = vadd.f32 %v623, 1.0
    %v628 = vadd.f32 %v625, 1.0
    %v629 = vrcp.pop %v626
    %v630 = vmul.f32 1.0, %v629
    %v631 = vrcp.pop %v627
    %v632 = vmul.f32 1.0, %v631
    %v633 = vrcp.pop %v628
    %v634 = vmul.f32 1.0, %v633
    %v635 = vtanh.pop %v616
    %v636 = vmul.f32 %v632, 0.0
    %v637 = vmul.f32 %v630, %v635
    %v638 = vadd.f32 %v636, %v637
    %v639 = vtanh.pop %v638
    %v640 = vmul.f32 %v634, %v639
    %v641 = vld [vmem:[#allocation2 + $0x20] sm:$0xff]
    %v642 = vld [vmem:[#allocation2 + $0x28] sm:$0xff]
    %v643 = vld [vmem:[#allocation2 + $0x30] sm:$0xff]
    %v644 = vld [vmem:[#allocation2 + $0x38] sm:$0xff]
    %645 = vmatprep.subr.mxu0 %v468
    %646 = vmatpush1.msra.mxu0 %v467
    %647 = vmatprep.subr.mxu0 %v464
    %648 = vmatpush1.msra.mxu0 %v463
    %649 = vmatprep.subr.mxu0 %v460
    %650 = vmatpush1.msra.mxu0 %v459
    %651 = vmatprep.subr.mxu0 %v456
    %652 = vmatpush1.msra.mxu0 %v455
    %653 = vmatprep.subr.mxu0 %v452
    %654 = vmatpush1.msra.mxu0 %v451
    %655 = vmatprep.subr.mxu0 %v448
    %656 = vmatpush1.msra.mxu0 %v447
    %657 = vmatprep.subr.mxu0 %v444
    %658 = vmatpush1.msra.mxu0 %v443
    %659 = vmatprep.subr.mxu0 %v440
    %660 = vmatpush1.msra.mxu0 %v439
    %661 = vmatprep.subr.mxu0 %v436
    %662 = vmatpush1.msra.mxu0 %v435
    %663 = vmatprep.subr.mxu0 %v432
    %664 = vmatpush1.msra.mxu0 %v431
    %665 = vmatprep.subr.mxu0 %v428
    %666 = vmatpush1.msra.mxu0 %v427
    %667 = vmatprep.subr.mxu0 %v424
    %668 = vmatpush1.msra.mxu0 %v423
    %669 = vmatprep.subr.mxu0 %v420
    %670 = vmatpush1.msra.mxu0 %v419
    %671 = vmatprep.subr.mxu0 %v416
    %672 = vmatpush1.msra.mxu0 %v415
    %673 = vmatprep.subr.mxu0 %v412
    %674 = vmatpush1.msra.mxu0 %v411
    %675 = vmatprep.subr.mxu0 %v408
    %676 = vmatpush1.msra.mxu0 %v407
    %677 = vmatprep.subr.mxu0 0.0
    %678 = vmatpush2.msra.mxu0 0.0
    %679 = vmatprep.subr.mxu0 0.0
    %680 = vmatpush2.msra.mxu0 0.0
    %681 = vmatprep.subr.mxu0 0.0
    %682 = vmatpush2.msra.mxu0 0.0
    %683 = vmatprep.subr.mxu0 0.0
    %684 = vmatpush2.msra.mxu0 0.0
    %685 = vmatprep.subr.mxu0 0.0
    %686 = vmatpush2.msra.mxu0 0.0
    %687 = vmatprep.subr.mxu0 0.0
    %688 = vmatpush2.msra.mxu0 0.0
    %689 = vmatprep.subr.mxu0 0.0
    %690 = vmatpush2.msra.mxu0 0.0
    %691 = vmatprep.subr.mxu0 0.0
    %692 = vmatpush2.msra.mxu0 0.0
    %693 = vmatprep.subr.mxu0 0.0
    %694 = vmatpush2.msra.mxu0 0.0
    %695 = vmatprep.subr.mxu0 0.0
    %696 = vmatpush2.msra.mxu0 0.0
    %697 = vmatprep.subr.mxu0 0.0
    %698 = vmatpush2.msra.mxu0 0.0
    %699 = vmatprep.subr.mxu0 0.0
    %700 = vmatpush2.msra.mxu0 0.0
    %701 = vmatprep.subr.mxu0 0.0
    %702 = vmatpush2.msra.mxu0 0.0
    %703 = vmatprep.subr.mxu0 0.0
    %704 = vmatpush2.msra.mxu0 0.0
    %705 = vmatprep.subr.mxu0 0.0
    %706 = vmatpush2.msra.mxu0 0.0
    %707 = vmatprep.subr.mxu0 0.0
    %708 = vmatpush2.msra.mxu0 0.0
    %709 = vmatprep.mubr.f32.mxu0 0.0
    %710 = vmatmul.mubr.f32.gmra.mxu0 %v640
    %v711 = vpop.f32.mrf.mxu0
    %v712 = vadd.f32 0.0, %v711
    %v713 = vpop.f32.mrf.mxu0
    %v714 = vadd.f32 0.0, %v713
    %715 = vdwg.mxu0
    %716 = vmatprep.subr.mxu0 %v470
    %717 = vmatpush1.msra.mxu0 %v469
    %718 = vmatprep.subr.mxu0 %v466
    %719 = vmatpush1.msra.mxu0 %v465
    %720 = vmatprep.subr.mxu0 %v462
    %721 = vmatpush1.msra.mxu0 %v461
    %722 = vmatprep.subr.mxu0 %v458
    %723 = vmatpush1.msra.mxu0 %v457
    %724 = vmatprep.subr.mxu0 %v454
    %725 = vmatpush1.msra.mxu0 %v453
    %726 = vmatprep.subr.mxu0 %v450
    %727 = vmatpush1.msra.mxu0 %v449
    %728 = vmatprep.subr.mxu0 %v446
    %729 = vmatpush1.msra.mxu0 %v445
    %730 = vmatprep.subr.mxu0 %v442
    %731 = vmatpush1.msra.mxu0 %v441
    %732 = vmatprep.subr.mxu0 %v438
    %733 = vmatpush1.msra.mxu0 %v437
    %734 = vmatprep.subr.mxu0 %v434
    %735 = vmatpush1.msra.mxu0 %v433
    %736 = vmatprep.subr.mxu0 %v430
    %737 = vmatpush1.msra.mxu0 %v429
    %738 = vmatprep.subr.mxu0 %v426
    %739 = vmatpush1.msra.mxu0 %v425
    %740 = vmatprep.subr.mxu0 %v422
    %741 = vmatpush1.msra.mxu0 %v421
    %742 = vmatprep.subr.mxu0 %v418
    %743 = vmatpush1.msra.mxu0 %v417
    %744 = vmatprep.subr.mxu0 %v414
    %745 = vmatpush1.msra.mxu0 %v413
    %746 = vmatprep.subr.mxu0 %v410
    %747 = vmatpush1.msra.mxu0 %v409
    %748 = vmatprep.subr.mxu0 0.0
    %749 = vmatpush2.msra.mxu0 0.0
    %750 = vmatprep.subr.mxu0 0.0
    %751 = vmatpush2.msra.mxu0 0.0
    %752 = vmatprep.subr.mxu0 0.0
    %753 = vmatpush2.msra.mxu0 0.0
    %754 = vmatprep.subr.mxu0 0.0
    %755 = vmatpush2.msra.mxu0 0.0
    %756 = vmatprep.subr.mxu0 0.0
    %757 = vmatpush2.msra.mxu0 0.0
    %758 = vmatprep.subr.mxu0 0.0
    %759 = vmatpush2.msra.mxu0 0.0
    %760 = vmatprep.subr.mxu0 0.0
    %761 = vmatpush2.msra.mxu0 0.0
    %762 = vmatprep.subr.mxu0 0.0
    %763 = vmatpush2.msra.mxu0 0.0
    %764 = vmatprep.subr.mxu0 0.0
    %765 = vmatpush2.msra.mxu0 0.0
    %766 = vmatprep.subr.mxu0 0.0
    %767 = vmatpush2.msra.mxu0 0.0
    %768 = vmatprep.subr.mxu0 0.0
    %769 = vmatpush2.msra.mxu0 0.0
    %770 = vmatprep.subr.mxu0 0.0
    %771 = vmatpush2.msra.mxu0 0.0
    %772 = vmatprep.subr.mxu0 0.0
    %773 = vmatpush2.msra.mxu0 0.0
    %774 = vmatprep.subr.mxu0 0.0
    %775 = vmatpush2.msra.mxu0 0.0
    %776 = vmatprep.subr.mxu0 0.0
    %777 = vmatpush2.msra.mxu0 0.0
    %778 = vmatprep.subr.mxu0 0.0
    %779 = vmatpush2.msra.mxu0 0.0
    %780 = vmatprep.mubr.f32.mxu0 0.0
    %781 = vmatmul.mubr.f32.gmra.mxu0 %v640
    %v782 = vpop.f32.mrf.mxu0
    %v783 = vadd.f32 0.0, %v782
    %v784 = vpop.f32.mrf.mxu0
    %v785 = vadd.f32 0.0, %v784
    %786 = vdwg.mxu0
    %v787 = vadd.f32 %v641, %v712
    %v788 = vadd.f32 %v642, %v714
    %v789 = vadd.f32 %v643, %v783
    %v790 = vadd.f32 %v644, %v785
    %v791 = vxor.u32 %v787, 2147483648
    %v792 = vxor.u32 %v788, 2147483648
    %v793 = vxor.u32 %v789, 2147483648
    %v794 = vmul.f32 %v791, 1.442695
    %v795 = vpow.pop %v794
    %v796 = vmul.f32 %v792, 1.442695
    %v797 = vpow.pop %v796
    %v798 = vmul.f32 %v793, 1.442695
    %v799 = vpow.pop %v798
    %v800 = vadd.f32 %v795, 1.0
    %v801 = vadd.f32 %v797, 1.0
    %v802 = vadd.f32 %v799, 1.0
    %v803 = vrcp.pop %v800
    %v804 = vmul.f32 1.0, %v803
    %v805 = vrcp.pop %v801
    %v806 = vmul.f32 1.0, %v805
    %v807 = vrcp.pop %v802
    %v808 = vmul.f32 1.0, %v807
    %v809 = vtanh.pop %v790
    %v810 = vmul.f32 %v806, %v638
    %v811 = vmul.f32 %v804, %v809
    %v812 = vadd.f32 %v810, %v811
    %v813 = vtanh.pop %v812
    %v814 = vmul.f32 %v808, %v813
    %v815 = vld [vmem:[#allocation2 + $0x40] sm:$0xff]
    %v816 = vld [vmem:[#allocation2 + $0x48] sm:$0xff]
    %v817 = vld [vmem:[#allocation2 + $0x50] sm:$0xff]
    %v818 = vld [vmem:[#allocation2 + $0x58] sm:$0xff]
    %819 = vmatprep.subr.mxu0 %v468
    %820 = vmatpush1.msra.mxu0 %v467
    %821 = vmatprep.subr.mxu0 %v464
    %822 = vmatpush1.msra.mxu0 %v463
    %823 = vmatprep.subr.mxu0 %v460
    %824 = vmatpush1.msra.mxu0 %v459
    %825 = vmatprep.subr.mxu0 %v456
    %826 = vmatpush1.msra.mxu0 %v455
    %827 = vmatprep.subr.mxu0 %v452
    %828 = vmatpush1.msra.mxu0 %v451
    %829 = vmatprep.subr.mxu0 %v448
    %830 = vmatpush1.msra.mxu0 %v447
    %831 = vmatprep.subr.mxu0 %v444
    %832 = vmatpush1.msra.mxu0 %v443
    %833 = vmatprep.subr.mxu0 %v440
    %834 = vmatpush1.msra.mxu0 %v439
    %835 = vmatprep.subr.mxu0 %v436
    %836 = vmatpush1.msra.mxu0 %v435
    %837 = vmatprep.subr.mxu0 %v432
    %838 = vmatpush1.msra.mxu0 %v431
    %839 = vmatprep.subr.mxu0 %v428
    %840 = vmatpush1.msra.mxu0 %v427
    %841 = vmatprep.subr.mxu0 %v424
    %842 = vmatpush1.msra.mxu0 %v423
    %843 = vmatprep.subr.mxu0 %v420
    %844 = vmatpush1.msra.mxu0 %v419
    %845 = vmatprep.subr.mxu0 %v416
    %846 = vmatpush1.msra.mxu0 %v415
    %847 = vmatprep.subr.mxu0 %v412
    %848 = vmatpush1.msra.mxu0 %v411
    %849 = vmatprep.subr.mxu0 %v408
    %850 = vmatpush1.msra.mxu0 %v407
    %851 = vmatprep.subr.mxu0 0.0
    %852 = vmatpush2.msra.mxu0 0.0
    %853 = vmatprep.subr.mxu0 0.0
    %854 = vmatpush2.msra.mxu0 0.0
    %855 = vmatprep.subr.mxu0 0.0
    %856 = vmatpush2.msra.mxu0 0.0
    %857 = vmatprep.subr.mxu0 0.0
    %858 = vmatpush2.msra.mxu0 0.0
    %859 = vmatprep.subr.mxu0 0.0
    %860 = vmatpush2.msra.mxu0 0.0
    %861 = vmatprep.subr.mxu0 0.0
    %862 = vmatpush2.msra.mxu0 0.0
    %863 = vmatprep.subr.mxu0 0.0
    %864 = vmatpush2.msra.mxu0 0.0
    %865 = vmatprep.subr.mxu0 0.0
    %866 = vmatpush2.msra.mxu0 0.0
    %867 = vmatprep.subr.mxu0 0.0
    %868 = vmatpush2.msra.mxu0 0.0
    %869 = vmatprep.subr.mxu0 0.0
    %870 = vmatpush2.msra.mxu0 0.0
    %871 = vmatprep.subr.mxu0 0.0
    %872 = vmatpush2.msra.mxu0 0.0
    %873 = vmatprep.subr.mxu0 0.0
    %874 = vmatpush2.msra.mxu0 0.0
    %875 = vmatprep.subr.mxu0 0.0
    %876 = vmatpush2.msra.mxu0 0.0
    %877 = vmatprep.subr.mxu0 0.0
    %878 = vmatpush2.msra.mxu0 0.0
    %879 = vmatprep.subr.mxu0 0.0
    %880 = vmatpush2.msra.mxu0 0.0
    %881 = vmatprep.subr.mxu0 0.0
    %882 = vmatpush2.msra.mxu0 0.0
    %883 = vmatprep.mubr.f32.mxu0 0.0
    %884 = vmatmul.mubr.f32.gmra.mxu0 %v814
    %v885 = vpop.f32.mrf.mxu0
    %v886 = vadd.f32 0.0, %v885
    %v887 = vpop.f32.mrf.mxu0
    %v888 = vadd.f32 0.0, %v887
    %889 = vdwg.mxu0
    %890 = vmatprep.subr.mxu0 %v470
    %891 = vmatpush1.msra.mxu0 %v469
    %892 = vmatprep.subr.mxu0 %v466
    %893 = vmatpush1.msra.mxu0 %v465
    %894 = vmatprep.subr.mxu0 %v462
    %895 = vmatpush1.msra.mxu0 %v461
    %896 = vmatprep.subr.mxu0 %v458
    %897 = vmatpush1.msra.mxu0 %v457
    %898 = vmatprep.subr.mxu0 %v454
    %899 = vmatpush1.msra.mxu0 %v453
    %900 = vmatprep.subr.mxu0 %v450
    %901 = vmatpush1.msra.mxu0 %v449
    %902 = vmatprep.subr.mxu0 %v446
    %903 = vmatpush1.msra.mxu0 %v445
    %904 = vmatprep.subr.mxu0 %v442
    %905 = vmatpush1.msra.mxu0 %v441
    %906 = vmatprep.subr.mxu0 %v438
    %907 = vmatpush1.msra.mxu0 %v437
    %908 = vmatprep.subr.mxu0 %v434
    %909 = vmatpush1.msra.mxu0 %v433
    %910 = vmatprep.subr.mxu0 %v430
    %911 = vmatpush1.msra.mxu0 %v429
    %912 = vmatprep.subr.mxu0 %v426
    %913 = vmatpush1.msra.mxu0 %v425
    %914 = vmatprep.subr.mxu0 %v422
    %915 = vmatpush1.msra.mxu0 %v421
    %916 = vmatprep.subr.mxu0 %v418
    %917 = vmatpush1.msra.mxu0 %v417
    %918 = vmatprep.subr.mxu0 %v414
    %919 = vmatpush1.msra.mxu0 %v413
    %920 = vmatprep.subr.mxu0 %v410
    %921 = vmatpush1.msra.mxu0 %v409
    %922 = vmatprep.subr.mxu0 0.0
    %923 = vmatpush2.msra.mxu0 0.0
    %924 = vmatprep.subr.mxu0 0.0
    %925 = vmatpush2.msra.mxu0 0.0
    %926 = vmatprep.subr.mxu0 0.0
    %927 = vmatpush2.msra.mxu0 0.0
    %928 = vmatprep.subr.mxu0 0.0
    %929 = vmatpush2.msra.mxu0 0.0
    %930 = vmatprep.subr.mxu0 0.0
    %931 = vmatpush2.msra.mxu0 0.0
    %932 = vmatprep.subr.mxu0 0.0
    %933 = vmatpush2.msra.mxu0 0.0
    %934 = vmatprep.subr.mxu0 0.0
    %935 = vmatpush2.msra.mxu0 0.0
    %936 = vmatprep.subr.mxu0 0.0
    %937 = vmatpush2.msra.mxu0 0.0
    %938 = vmatprep.subr.mxu0 0.0
    %939 = vmatpush2.msra.mxu0 0.0
    %940 = vmatprep.subr.mxu0 0.0
    %941 = vmatpush2.msra.mxu0 0.0
    %942 = vmatprep.subr.mxu0 0.0
    %943 = vmatpush2.msra.mxu0 0.0
    %944 = vmatprep.subr.mxu0 0.0
    %945 = vmatpush2.msra.mxu0 0.0
    %946 = vmatprep.subr.mxu0 0.0
    %947 = vmatpush2.msra.mxu0 0.0
    %948 = vmatprep.subr.mxu0 0.0
    %949 = vmatpush2.msra.mxu0 0.0
    %950 = vmatprep.subr.mxu0 0.0
    %951 = vmatpush2.msra.mxu0 0.0
    %952 = vmatprep.subr.mxu0 0.0
    %953 = vmatpush2.msra.mxu0 0.0
    %954 = vmatprep.mubr.f32.mxu0 0.0
    %955 = vmatmul.mubr.f32.gmra.mxu0 %v814
    %v956 = vpop.f32.mrf.mxu0
    %v957 = vadd.f32 0.0, %v956
    %v958 = vpop.f32.mrf.mxu0
    %v959 = vadd.f32 0.0, %v958
    %960 = vdwg.mxu0
    %v961 = vadd.f32 %v815, %v886
    %v962 = vadd.f32 %v816, %v888
    %v963 = vadd.f32 %v817, %v957
    %v964 = vadd.f32 %v818, %v959
    %v965 = vxor.u32 %v961, 2147483648
    %v966 = vxor.u32 %v962, 2147483648
    %v967 = vxor.u32 %v963, 2147483648
    %v968 = vmul.f32 %v965, 1.442695
    %v969 = vpow.pop %v968
    %v970 = vmul.f32 %v966, 1.442695
    %v971 = vpow.pop %v970
    %v972 = vmul.f32 %v967, 1.442695
    %v973 = vpow.pop %v972
    %v974 = vadd.f32 %v969, 1.0
    %v975 = vadd.f32 %v971, 1.0
    %v976 = vadd.f32 %v973, 1.0
    %v977 = vrcp.pop %v974
    %v978 = vmul.f32 1.0, %v977
    %v979 = vrcp.pop %v975
    %v980 = vmul.f32 1.0, %v979
    %v981 = vrcp.pop %v976
    %v982 = vmul.f32 1.0, %v981
    %v983 = vtanh.pop %v964
    %v984 = vmul.f32 %v980, %v812
    %v985 = vmul.f32 %v978, %v983
    %v986 = vadd.f32 %v984, %v985
    %v987 = vtanh.pop %v986
    %v988 = vmul.f32 %v982, %v987
    %v989 = vld [vmem:[#allocation2 + $0x60] sm:$0xff]
    %v990 = vld [vmem:[#allocation2 + $0x68] sm:$0xff]
    %v991 = vld [vmem:[#allocation2 + $0x70] sm:$0xff]
    %v992 = vld [vmem:[#allocation2 + $0x78] sm:$0xff]
    %993 = vmatprep.subr.mxu0 %v468
    %994 = vmatpush1.msra.mxu0 %v467
    %995 = vmatprep.subr.mxu0 %v464
    %996 = vmatpush1.msra.mxu0 %v463
    %997 = vmatprep.subr.mxu0 %v460
    %998 = vmatpush1.msra.mxu0 %v459
    %999 = vmatprep.subr.mxu0 %v456
    %1000 = vmatpush1.msra.mxu0 %v455
    %1001 = vmatprep.subr.mxu0 %v452
    %1002 = vmatpush1.msra.mxu0 %v451
    %1003 = vmatprep.subr.mxu0 %v448
    %1004 = vmatpush1.msra.mxu0 %v447
    %1005 = vmatprep.subr.mxu0 %v444
    %1006 = vmatpush1.msra.mxu0 %v443
    %1007 = vmatprep.subr.mxu0 %v440
    %1008 = vmatpush1.msra.mxu0 %v439
    %1009 = vmatprep.subr.mxu0 %v436
    %1010 = vmatpush1.msra.mxu0 %v435
    %1011 = vmatprep.subr.mxu0 %v432
    %1012 = vmatpush1.msra.mxu0 %v431
    %1013 = vmatprep.subr.mxu0 %v428
    %1014 = vmatpush1.msra.mxu0 %v427
    %1015 = vmatprep.subr.mxu0 %v424
    %1016 = vmatpush1.msra.mxu0 %v423
    %1017 = vmatprep.subr.mxu0 %v420
    %1018 = vmatpush1.msra.mxu0 %v419
    %1019 = vmatprep.subr.mxu0 %v416
    %1020 = vmatpush1.msra.mxu0 %v415
    %1021 = vmatprep.subr.mxu0 %v412
    %1022 = vmatpush1.msra.mxu0 %v411
    %1023 = vmatprep.subr.mxu0 %v408
    %1024 = vmatpush1.msra.mxu0 %v407
    %1025 = vmatprep.subr.mxu0 0.0
    %1026 = vmatpush2.msra.mxu0 0.0
    %1027 = vmatprep.subr.mxu0 0.0
    %1028 = vmatpush2.msra.mxu0 0.0
    %1029 = vmatprep.subr.mxu0 0.0
    %1030 = vmatpush2.msra.mxu0 0.0
    %1031 = vmatprep.subr.mxu0 0.0
    %1032 = vmatpush2.msra.mxu0 0.0
    %1033 = vmatprep.subr.mxu0 0.0
    %1034 = vmatpush2.msra.mxu0 0.0
    %1035 = vmatprep.subr.mxu0 0.0
    %1036 = vmatpush2.msra.mxu0 0.0
    %1037 = vmatprep.subr.mxu0 0.0
    %1038 = vmatpush2.msra.mxu0 0.0
    %1039 = vmatprep.subr.mxu0 0.0
    %1040 = vmatpush2.msra.mxu0 0.0
    %1041 = vmatprep.subr.mxu0 0.0
    %1042 = vmatpush2.msra.mxu0 0.0
    %1043 = vmatprep.subr.mxu0 0.0
    %1044 = vmatpush2.msra.mxu0 0.0
    %1045 = vmatprep.subr.mxu0 0.0
    %1046 = vmatpush2.msra.mxu0 0.0
    %1047 = vmatprep.subr.mxu0 0.0
    %1048 = vmatpush2.msra.mxu0 0.0
    %1049 = vmatprep.subr.mxu0 0.0
    %1050 = vmatpush2.msra.mxu0 0.0
    %1051 = vmatprep.subr.mxu0 0.0
    %1052 = vmatpush2.msra.mxu0 0.0
    %1053 = vmatprep.subr.mxu0 0.0
    %1054 = vmatpush2.msra.mxu0 0.0
    %1055 = vmatprep.subr.mxu0 0.0
    %1056 = vmatpush2.msra.mxu0 0.0
    %1057 = vmatprep.mubr.f32.mxu0 0.0
    %1058 = vmatmul.mubr.f32.gmra.mxu0 %v988
    %v1059 = vpop.f32.mrf.mxu0
    %v1060 = vadd.f32 0.0, %v1059
    %v1061 = vpop.f32.mrf.mxu0
    %v1062 = vadd.f32 0.0, %v1061
    %1063 = vdwg.mxu0
    %1064 = vmatprep.subr.mxu0 %v470
    %1065 = vmatpush1.msra.mxu0 %v469
    %1066 = vmatprep.subr.mxu0 %v466
    %1067 = vmatpush1.msra.mxu0 %v465
    %1068 = vmatprep.subr.mxu0 %v462
    %1069 = vmatpush1.msra.mxu0 %v461
    %1070 = vmatprep.subr.mxu0 %v458
    %1071 = vmatpush1.msra.mxu0 %v457
    %1072 = vmatprep.subr.mxu0 %v454
    %1073 = vmatpush1.msra.mxu0 %v453
    %1074 = vmatprep.subr.mxu0 %v450
    %1075 = vmatpush1.msra.mxu0 %v449
    %1076 = vmatprep.subr.mxu0 %v446
    %1077 = vmatpush1.msra.mxu0 %v445
    %1078 = vmatprep.subr.mxu0 %v442
    %1079 = vmatpush1.msra.mxu0 %v441
    %1080 = vmatprep.subr.mxu0 %v438
    %1081 = vmatpush1.msra.mxu0 %v437
    %1082 = vmatprep.subr.mxu0 %v434
    %1083 = vmatpush1.msra.mxu0 %v433
    %1084 = vmatprep.subr.mxu0 %v430
    %1085 = vmatpush1.msra.mxu0 %v429
    %1086 = vmatprep.subr.mxu0 %v426
    %1087 = vmatpush1.msra.mxu0 %v425
    %1088 = vmatprep.subr.mxu0 %v422
    %1089 = vmatpush1.msra.mxu0 %v421
    %1090 = vmatprep.subr.mxu0 %v418
    %1091 = vmatpush1.msra.mxu0 %v417
    %1092 = vmatprep.subr.mxu0 %v414
    %1093 = vmatpush1.msra.mxu0 %v413
    %1094 = vmatprep.subr.mxu0 %v410
    %1095 = vmatpush1.msra.mxu0 %v409
    %1096 = vmatprep.subr.mxu0 0.0
    %1097 = vmatpush2.msra.mxu0 0.0
    %1098 = vmatprep.subr.mxu0 0.0
    %1099 = vmatpush2.msra.mxu0 0.0
    %1100 = vmatprep.subr.mxu0 0.0
    %1101 = vmatpush2.msra.mxu0 0.0
    %1102 = vmatprep.subr.mxu0 0.0
    %1103 = vmatpush2.msra.mxu0 0.0
    %1104 = vmatprep.subr.mxu0 0.0
    %1105 = vmatpush2.msra.mxu0 0.0
    %1106 = vmatprep.subr.mxu0 0.0
    %1107 = vmatpush2.msra.mxu0 0.0
    %1108 = vmatprep.subr.mxu0 0.0
    %1109 = vmatpush2.msra.mxu0 0.0
    %1110 = vmatprep.subr.mxu0 0.0
    %1111 = vmatpush2.msra.mxu0 0.0
    %1112 = vmatprep.subr.mxu0 0.0
    %1113 = vmatpush2.msra.mxu0 0.0
    %1114 = vmatprep.subr.mxu0 0.0
    %1115 = vmatpush2.msra.mxu0 0.0
    %1116 = vmatprep.subr.mxu0 0.0
    %1117 = vmatpush2.msra.mxu0 0.0
    %1118 = vmatprep.subr.mxu0 0.0
    %1119 = vmatpush2.msra.mxu0 0.0
    %1120 = vmatprep.subr.mxu0 0.0
    %1121 = vmatpush2.msra.mxu0 0.0
    %1122 = vmatprep.subr.mxu0 0.0
    %1123 = vmatpush2.msra.mxu0 0.0
    %1124 = vmatprep.subr.mxu0 0.0
    %1125 = vmatpush2.msra.mxu0 0.0
    %1126 = vmatprep.subr.mxu0 0.0
    %1127 = vmatpush2.msra.mxu0 0.0
    %1128 = vmatprep.mubr.f32.mxu0 0.0
    %1129 = vmatmul.mubr.f32.gmra.mxu0 %v988
    %v1130 = vpop.f32.mrf.mxu0
    %v1131 = vadd.f32 0.0, %v1130
    %v1132 = vpop.f32.mrf.mxu0
    %v1133 = vadd.f32 0.0, %v1132
    %1134 = vdwg.mxu0
    %v1135 = vadd.f32 %v989, %v1060
    %v1136 = vadd.f32 %v990, %v1062
    %v1137 = vadd.f32 %v991, %v1131
    %v1138 = vadd.f32 %v992, %v1133
    %v1139 = vxor.u32 %v1135, 2147483648
    %v1140 = vxor.u32 %v1136, 2147483648
    %v1141 = vxor.u32 %v1137, 2147483648
    %v1142 = vmul.f32 %v1139, 1.442695
    %v1143 = vpow.pop %v1142
    %v1144 = vmul.f32 %v1140, 1.442695
    %v1145 = vpow.pop %v1144
    %v1146 = vmul.f32 %v1141, 1.442695
    %v1147 = vpow.pop %v1146
    %v1148 = vadd.f32 %v1143, 1.0
    %v1149 = vadd.f32 %v1145, 1.0
    %v1150 = vadd.f32 %v1147, 1.0
    %v1151 = vrcp.pop %v1148
    %v1152 = vmul.f32 1.0, %v1151
    %v1153 = vrcp.pop %v1149
    %v1154 = vmul.f32 1.0, %v1153
    %v1155 = vrcp.pop %v1150
    %v1156 = vmul.f32 1.0, %v1155
    %v1157 = vtanh.pop %v1138
    %v1158 = vmul.f32 %v1154, %v986
    %v1159 = vmul.f32 %v1152, %v1157
    %v1160 = vadd.f32 %v1158, %v1159
    %v1161 = vtanh.pop %v1160
    %v1162 = vmul.f32 %v1156, %v1161
    %v1163 = vld [vmem:[#allocation2 + $0x80] sm:$0xff]
    %v1164 = vld [vmem:[#allocation2 + $0x88] sm:$0xff]
    %v1165 = vld [vmem:[#allocation2 + $0x90] sm:$0xff]
    %v1166 = vld [vmem:[#allocation2 + $0x98] sm:$0xff]
    %1167 = vmatprep.subr.mxu0 %v468
    %1168 = vmatpush1.msra.mxu0 %v467
    %1169 = vmatprep.subr.mxu0 %v464
    %1170 = vmatpush1.msra.mxu0 %v463
    %1171 = vmatprep.subr.mxu0 %v460
    %1172 = vmatpush1.msra.mxu0 %v459
    %1173 = vmatprep.subr.mxu0 %v456
    %1174 = vmatpush1.msra.mxu0 %v455
    %1175 = vmatprep.subr.mxu0 %v452
    %1176 = vmatpush1.msra.mxu0 %v451
    %1177 = vmatprep.subr.mxu0 %v448
    %1178 = vmatpush1.msra.mxu0 %v447
    %1179 = vmatprep.subr.mxu0 %v444
    %1180 = vmatpush1.msra.mxu0 %v443
    %1181 = vmatprep.subr.mxu0 %v440
    %1182 = vmatpush1.msra.mxu0 %v439
    %1183 = vmatprep.subr.mxu0 %v436
    %1184 = vmatpush1.msra.mxu0 %v435
    %1185 = vmatprep.subr.mxu0 %v432
    %1186 = vmatpush1.msra.mxu0 %v431
    %1187 = vmatprep.subr.mxu0 %v428
    %1188 = vmatpush1.msra.mxu0 %v427
    %1189 = vmatprep.subr.mxu0 %v424
    %1190 = vmatpush1.msra.mxu0 %v423
    %1191 = vmatprep.subr.mxu0 %v420
    %1192 = vmatpush1.msra.mxu0 %v419
    %1193 = vmatprep.subr.mxu0 %v416
    %1194 = vmatpush1.msra.mxu0 %v415
    %1195 = vmatprep.subr.mxu0 %v412
    %1196 = vmatpush1.msra.mxu0 %v411
    %1197 = vmatprep.subr.mxu0 %v408
    %1198 = vmatpush1.msra.mxu0 %v407
    %1199 = vmatprep.subr.mxu0 0.0
    %1200 = vmatpush2.msra.mxu0 0.0
    %1201 = vmatprep.subr.mxu0 0.0
    %1202 = vmatpush2.msra.mxu0 0.0
    %1203 = vmatprep.subr.mxu0 0.0
    %1204 = vmatpush2.msra.mxu0 0.0
    %1205 = vmatprep.subr.mxu0 0.0
    %1206 = vmatpush2.msra.mxu0 0.0
    %1207 = vmatprep.subr.mxu0 0.0
    %1208 = vmatpush2.msra.mxu0 0.0
    %1209 = vmatprep.subr.mxu0 0.0
    %1210 = vmatpush2.msra.mxu0 0.0
    %1211 = vmatprep.subr.mxu0 0.0
    %1212 = vmatpush2.msra.mxu0 0.0
    %1213 = vmatprep.subr.mxu0 0.0
    %1214 = vmatpush2.msra.mxu0 0.0
    %1215 = vmatprep.subr.mxu0 0.0
    %1216 = vmatpush2.msra.mxu0 0.0
    %1217 = vmatprep.subr.mxu0 0.0
    %1218 = vmatpush2.msra.mxu0 0.0
    %1219 = vmatprep.subr.mxu0 0.0
    %1220 = vmatpush2.msra.mxu0 0.0
    %1221 = vmatprep.subr.mxu0 0.0
    %1222 = vmatpush2.msra.mxu0 0.0
    %1223 = vmatprep.subr.mxu0 0.0
    %1224 = vmatpush2.msra.mxu0 0.0
    %1225 = vmatprep.subr.mxu0 0.0
    %1226 = vmatpush2.msra.mxu0 0.0
    %1227 = vmatprep.subr.mxu0 0.0
    %1228 = vmatpush2.msra.mxu0 0.0
    %1229 = vmatprep.subr.mxu0 0.0
    %1230 = vmatpush2.msra.mxu0 0.0
    %1231 = vmatprep.mubr.f32.mxu0 0.0
    %1232 = vmatmul.mubr.f32.gmra.mxu0 %v1162
    %v1233 = vpop.f32.mrf.mxu0
    %v1234 = vadd.f32 0.0, %v1233
    %v1235 = vpop.f32.mrf.mxu0
    %v1236 = vadd.f32 0.0, %v1235
    %1237 = vdwg.mxu0
    %1238 = vmatprep.subr.mxu0 %v470
    %1239 = vmatpush1.msra.mxu0 %v469
    %1240 = vmatprep.subr.mxu0 %v466
    %1241 = vmatpush1.msra.mxu0 %v465
    %1242 = vmatprep.subr.mxu0 %v462
    %1243 = vmatpush1.msra.mxu0 %v461
    %1244 = vmatprep.subr.mxu0 %v458
    %1245 = vmatpush1.msra.mxu0 %v457
    %1246 = vmatprep.subr.mxu0 %v454
    %1247 = vmatpush1.msra.mxu0 %v453
    %1248 = vmatprep.subr.mxu0 %v450
    %1249 = vmatpush1.msra.mxu0 %v449
    %1250 = vmatprep.subr.mxu0 %v446
    %1251 = vmatpush1.msra.mxu0 %v445
    %1252 = vmatprep.subr.mxu0 %v442
    %1253 = vmatpush1.msra.mxu0 %v441
    %1254 = vmatprep.subr.mxu0 %v438
    %1255 = vmatpush1.msra.mxu0 %v437
    %1256 = vmatprep.subr.mxu0 %v434
    %1257 = vmatpush1.msra.mxu0 %v433
    %1258 = vmatprep.subr.mxu0 %v430
    %1259 = vmatpush1.msra.mxu0 %v429
    %1260 = vmatprep.subr.mxu0 %v426
    %1261 = vmatpush1.msra.mxu0 %v425
    %1262 = vmatprep.subr.mxu0 %v422
    %1263 = vmatpush1.msra.mxu0 %v421
    %1264 = vmatprep.subr.mxu0 %v418
    %1265 = vmatpush1.msra.mxu0 %v417
    %1266 = vmatprep.subr.mxu0 %v414
    %1267 = vmatpush1.msra.mxu0 %v413
    %1268 = vmatprep.subr.mxu0 %v410
    %1269 = vmatpush1.msra.mxu0 %v409
    %1270 = vmatprep.subr.mxu0 0.0
    %1271 = vmatpush2.msra.mxu0 0.0
    %1272 = vmatprep.subr.mxu0 0.0
    %1273 = vmatpush2.msra.mxu0 0.0
    %1274 = vmatprep.subr.mxu0 0.0
    %1275 = vmatpush2.msra.mxu0 0.0
    %1276 = vmatprep.subr.mxu0 0.0
    %1277 = vmatpush2.msra.mxu0 0.0
    %1278 = vmatprep.subr.mxu0 0.0
    %1279 = vmatpush2.msra.mxu0 0.0
    %1280 = vmatprep.subr.mxu0 0.0
    %1281 = vmatpush2.msra.mxu0 0.0
    %1282 = vmatprep.subr.mxu0 0.0
    %1283 = vmatpush2.msra.mxu0 0.0
    %1284 = vmatprep.subr.mxu0 0.0
    %1285 = vmatpush2.msra.mxu0 0.0
    %1286 = vmatprep.subr.mxu0 0.0
    %1287 = vmatpush2.msra.mxu0 0.0
    %1288 = vmatprep.subr.mxu0 0.0
    %1289 = vmatpush2.msra.mxu0 0.0
    %1290 = vmatprep.subr.mxu0 0.0
    %1291 = vmatpush2.msra.mxu0 0.0
    %1292 = vmatprep.subr.mxu0 0.0
    %1293 = vmatpush2.msra.mxu0 0.0
    %1294 = vmatprep.subr.mxu0 0.0
    %1295 = vmatpush2.msra.mxu0 0.0
    %1296 = vmatprep.subr.mxu0 0.0
    %1297 = vmatpush2.msra.mxu0 0.0
    %1298 = vmatprep.subr.mxu0 0.0
    %1299 = vmatpush2.msra.mxu0 0.0
    %1300 = vmatprep.subr.mxu0 0.0
    %1301 = vmatpush2.msra.mxu0 0.0
    %1302 = vmatprep.mubr.f32.mxu0 0.0
    %1303 = vmatmul.mubr.f32.gmra.mxu0 %v1162
    %v1304 = vpop.f32.mrf.mxu0
    %v1305 = vadd.f32 0.0, %v1304
    %v1306 = vpop.f32.mrf.mxu0
    %v1307 = vadd.f32 0.0, %v1306
    %1308 = vdwg.mxu0
    %v1309 = vadd.f32 %v1163, %v1234
    %v1310 = vadd.f32 %v1164, %v1236
    %v1311 = vadd.f32 %v1165, %v1305
    %v1312 = vadd.f32 %v1166, %v1307
    %v1313 = vxor.u32 %v1309, 2147483648
    %v1314 = vxor.u32 %v1310, 2147483648
    %v1315 = vxor.u32 %v1311, 2147483648
    %v1316 = vmul.f32 %v1313, 1.442695
    %v1317 = vpow.pop %v1316
    %v1318 = vmul.f32 %v1314, 1.442695
    %v1319 = vpow.pop %v1318
    %v1320 = vmul.f32 %v1315, 1.442695
    %v1321 = vpow.pop %v1320
    %v1322 = vadd.f32 %v1317, 1.0
    %v1323 = vadd.f32 %v1319, 1.0
    %v1324 = vadd.f32 %v1321, 1.0
    %v1325 = vrcp.pop %v1322
    %v1326 = vmul.f32 1.0, %v1325
    %v1327 = vrcp.pop %v1323
    %v1328 = vmul.f32 1.0, %v1327
    %v1329 = vrcp.pop %v1324
    %v1330 = vmul.f32 1.0, %v1329
    %v1331 = vtanh.pop %v1312
    %v1332 = vmul.f32 %v1328, %v1160
    %v1333 = vmul.f32 %v1326, %v1331
    %v1334 = vadd.f32 %v1332, %v1333
    %v1335 = vtanh.pop %v1334
    %v1336 = vmul.f32 %v1330, %v1335
    %v1337 = vld [vmem:[#allocation2 + $0xa0] sm:$0xff]
    %v1338 = vld [vmem:[#allocation2 + $0xa8] sm:$0xff]
    %v1339 = vld [vmem:[#allocation2 + $0xb0] sm:$0xff]
    %v1340 = vld [vmem:[#allocation2 + $0xb8] sm:$0xff]
    %1341 = vmatprep.subr.mxu0 %v468
    %1342 = vmatpush1.msra.mxu0 %v467
    %1343 = vmatprep.subr.mxu0 %v464
    %1344 = vmatpush1.msra.mxu0 %v463
    %1345 = vmatprep.subr.mxu0 %v460
    %1346 = vmatpush1.msra.mxu0 %v459
    %1347 = vmatprep.subr.mxu0 %v456
    %1348 = vmatpush1.msra.mxu0 %v455
    %1349 = vmatprep.subr.mxu0 %v452
    %1350 = vmatpush1.msra.mxu0 %v451
    %1351 = vmatprep.subr.mxu0 %v448
    %1352 = vmatpush1.msra.mxu0 %v447
    %1353 = vmatprep.subr.mxu0 %v444
    %1354 = vmatpush1.msra.mxu0 %v443
    %1355 = vmatprep.subr.mxu0 %v440
    %1356 = vmatpush1.msra.mxu0 %v439
    %1357 = vmatprep.subr.mxu0 %v436
    %1358 = vmatpush1.msra.mxu0 %v435
    %1359 = vmatprep.subr.mxu0 %v432
    %1360 = vmatpush1.msra.mxu0 %v431
    %1361 = vmatprep.subr.mxu0 %v428
    %1362 = vmatpush1.msra.mxu0 %v427
    %1363 = vmatprep.subr.mxu0 %v424
    %1364 = vmatpush1.msra.mxu0 %v423
    %1365 = vmatprep.subr.mxu0 %v420
    %1366 = vmatpush1.msra.mxu0 %v419
    %1367 = vmatprep.subr.mxu0 %v416
    %1368 = vmatpush1.msra.mxu0 %v415
    %1369 = vmatprep.subr.mxu0 %v412
    %1370 = vmatpush1.msra.mxu0 %v411
    %1371 = vmatprep.subr.mxu0 %v408
    %1372 = vmatpush1.msra.mxu0 %v407
    %1373 = vmatprep.subr.mxu0 0.0
    %1374 = vmatpush2.msra.mxu0 0.0
    %1375 = vmatprep.subr.mxu0 0.0
    %1376 = vmatpush2.msra.mxu0 0.0
    %1377 = vmatprep.subr.mxu0 0.0
    %1378 = vmatpush2.msra.mxu0 0.0
    %1379 = vmatprep.subr.mxu0 0.0
    %1380 = vmatpush2.msra.mxu0 0.0
    %1381 = vmatprep.subr.mxu0 0.0
    %1382 = vmatpush2.msra.mxu0 0.0
    %1383 = vmatprep.subr.mxu0 0.0
    %1384 = vmatpush2.msra.mxu0 0.0
    %1385 = vmatprep.subr.mxu0 0.0
    %1386 = vmatpush2.msra.mxu0 0.0
    %1387 = vmatprep.subr.mxu0 0.0
    %1388 = vmatpush2.msra.mxu0 0.0
    %1389 = vmatprep.subr.mxu0 0.0
    %1390 = vmatpush2.msra.mxu0 0.0
    %1391 = vmatprep.subr.mxu0 0.0
    %1392 = vmatpush2.msra.mxu0 0.0
    %1393 = vmatprep.subr.mxu0 0.0
    %1394 = vmatpush2.msra.mxu0 0.0
    %1395 = vmatprep.subr.mxu0 0.0
    %1396 = vmatpush2.msra.mxu0 0.0
    %1397 = vmatprep.subr.mxu0 0.0
    %1398 = vmatpush2.msra.mxu0 0.0
    %1399 = vmatprep.subr.mxu0 0.0
    %1400 = vmatpush2.msra.mxu0 0.0
    %1401 = vmatprep.subr.mxu0 0.0
    %1402 = vmatpush2.msra.mxu0 0.0
    %1403 = vmatprep.subr.mxu0 0.0
    %1404 = vmatpush2.msra.mxu0 0.0
    %1405 = vmatprep.mubr.f32.mxu0 0.0
    %1406 = vmatmul.mubr.f32.gmra.mxu0 %v1336
    %v1407 = vpop.f32.mrf.mxu0
    %v1408 = vadd.f32 0.0, %v1407
    %v1409 = vpop.f32.mrf.mxu0
    %v1410 = vadd.f32 0.0, %v1409
    %1411 = vdwg.mxu0
    %1412 = vmatprep.subr.mxu0 %v470
    %1413 = vmatpush1.msra.mxu0 %v469
    %1414 = vmatprep.subr.mxu0 %v466
    %1415 = vmatpush1.msra.mxu0 %v465
    %1416 = vmatprep.subr.mxu0 %v462
    %1417 = vmatpush1.msra.mxu0 %v461
    %1418 = vmatprep.subr.mxu0 %v458
    %1419 = vmatpush1.msra.mxu0 %v457
    %1420 = vmatprep.subr.mxu0 %v454
    %1421 = vmatpush1.msra.mxu0 %v453
    %1422 = vmatprep.subr.mxu0 %v450
    %1423 = vmatpush1.msra.mxu0 %v449
    %1424 = vmatprep.subr.mxu0 %v446
    %1425 = vmatpush1.msra.mxu0 %v445
    %1426 = vmatprep.subr.mxu0 %v442
    %1427 = vmatpush1.msra.mxu0 %v441
    %1428 = vmatprep.subr.mxu0 %v438
    %1429 = vmatpush1.msra.mxu0 %v437
    %1430 = vmatprep.subr.mxu0 %v434
    %1431 = vmatpush1.msra.mxu0 %v433
    %1432 = vmatprep.subr.mxu0 %v430
    %1433 = vmatpush1.msra.mxu0 %v429
    %1434 = vmatprep.subr.mxu0 %v426
    %1435 = vmatpush1.msra.mxu0 %v425
    %1436 = vmatprep.subr.mxu0 %v422
    %1437 = vmatpush1.msra.mxu0 %v421
    %1438 = vmatprep.subr.mxu0 %v418
    %1439 = vmatpush1.msra.mxu0 %v417
    %1440 = vmatprep.subr.mxu0 %v414
    %1441 = vmatpush1.msra.mxu0 %v413
    %1442 = vmatprep.subr.mxu0 %v410
    %1443 = vmatpush1.msra.mxu0 %v409
    %1444 = vmatprep.subr.mxu0 0.0
    %1445 = vmatpush2.msra.mxu0 0.0
    %1446 = vmatprep.subr.mxu0 0.0
    %1447 = vmatpush2.msra.mxu0 0.0
    %1448 = vmatprep.subr.mxu0 0.0
    %1449 = vmatpush2.msra.mxu0 0.0
    %1450 = vmatprep.subr.mxu0 0.0
    %1451 = vmatpush2.msra.mxu0 0.0
    %1452 = vmatprep.subr.mxu0 0.0
    %1453 = vmatpush2.msra.mxu0 0.0
    %1454 = vmatprep.subr.mxu0 0.0
    %1455 = vmatpush2.msra.mxu0 0.0
    %1456 = vmatprep.subr.mxu0 0.0
    %1457 = vmatpush2.msra.mxu0 0.0
    %1458 = vmatprep.subr.mxu0 0.0
    %1459 = vmatpush2.msra.mxu0 0.0
    %1460 = vmatprep.subr.mxu0 0.0
    %1461 = vmatpush2.msra.mxu0 0.0
    %1462 = vmatprep.subr.mxu0 0.0
    %1463 = vmatpush2.msra.mxu0 0.0
    %1464 = vmatprep.subr.mxu0 0.0
    %1465 = vmatpush2.msra.mxu0 0.0
    %1466 = vmatprep.subr.mxu0 0.0
    %1467 = vmatpush2.msra.mxu0 0.0
    %1468 = vmatprep.subr.mxu0 0.0
    %1469 = vmatpush2.msra.mxu0 0.0
    %1470 = vmatprep.subr.mxu0 0.0
    %1471 = vmatpush2.msra.mxu0 0.0
    %1472 = vmatprep.subr.mxu0 0.0
    %1473 = vmatpush2.msra.mxu0 0.0
    %1474 = vmatprep.subr.mxu0 0.0
    %1475 = vmatpush2.msra.mxu0 0.0
    %1476 = vmatprep.mubr.f32.mxu0 0.0
    %1477 = vmatmul.mubr.f32.gmra.mxu0 %v1336
    %v1478 = vpop.f32.mrf.mxu0
    %v1479 = vadd.f32 0.0, %v1478
    %v1480 = vpop.f32.mrf.mxu0
    %v1481 = vadd.f32 0.0, %v1480
    %1482 = vdwg.mxu0
    %v1483 = vadd.f32 %v1337, %v1408
    %v1484 = vadd.f32 %v1338, %v1410
    %v1485 = vadd.f32 %v1339, %v1479
    %v1486 = vadd.f32 %v1340, %v1481
    %v1487 = vxor.u32 %v1483, 2147483648
    %v1488 = vxor.u32 %v1484, 2147483648
    %v1489 = vxor.u32 %v1485, 2147483648
    %v1490 = vmul.f32 %v1487, 1.442695
    %v1491 = vpow.pop %v1490
    %v1492 = vmul.f32 %v1488, 1.442695
    %v1493 = vpow.pop %v1492
    %v1494 = vmul.f32 %v1489, 1.442695
    %v1495 = vpow.pop %v1494
    %v1496 = vadd.f32 %v1491, 1.0
    %v1497 = vadd.f32 %v1493, 1.0
    %v1498 = vadd.f32 %v1495, 1.0
    %v1499 = vrcp.pop %v1496
    %v1500 = vmul.f32 1.0, %v1499
    %v1501 = vrcp.pop %v1497
    %v1502 = vmul.f32 1.0, %v1501
    %v1503 = vrcp.pop %v1498
    %v1504 = vmul.f32 1.0, %v1503
    %v1505 = vtanh.pop %v1486
    %v1506 = vmul.f32 %v1502, %v1334
    %v1507 = vmul.f32 %v1500, %v1505
    %v1508 = vadd.f32 %v1506, %v1507
    %v1509 = vtanh.pop %v1508
    %v1510 = vmul.f32 %v1504, %v1509
    %v1511 = vld [vmem:[#allocation2 + $0xc0] sm:$0xff]
    %v1512 = vld [vmem:[#allocation2 + $0xc8] sm:$0xff]
    %v1513 = vld [vmem:[#allocation2 + $0xd0] sm:$0xff]
    %v1514 = vld [vmem:[#allocation2 + $0xd8] sm:$0xff]
    %1515 = vmatprep.subr.mxu0 %v468
    %1516 = vmatpush1.msra.mxu0 %v467
    %1517 = vmatprep.subr.mxu0 %v464
    %1518 = vmatpush1.msra.mxu0 %v463
    %1519 = vmatprep.subr.mxu0 %v460
    %1520 = vmatpush1.msra.mxu0 %v459
    %1521 = vmatprep.subr.mxu0 %v456
    %1522 = vmatpush1.msra.mxu0 %v455
    %1523 = vmatprep.subr.mxu0 %v452
    %1524 = vmatpush1.msra.mxu0 %v451
    %1525 = vmatprep.subr.mxu0 %v448
    %1526 = vmatpush1.msra.mxu0 %v447
    %1527 = vmatprep.subr.mxu0 %v444
    %1528 = vmatpush1.msra.mxu0 %v443
    %1529 = vmatprep.subr.mxu0 %v440
    %1530 = vmatpush1.msra.mxu0 %v439
    %1531 = vmatprep.subr.mxu0 %v436
    %1532 = vmatpush1.msra.mxu0 %v435
    %1533 = vmatprep.subr.mxu0 %v432
    %1534 = vmatpush1.msra.mxu0 %v431
    %1535 = vmatprep.subr.mxu0 %v428
    %1536 = vmatpush1.msra.mxu0 %v427
    %1537 = vmatprep.subr.mxu0 %v424
    %1538 = vmatpush1.msra.mxu0 %v423
    %1539 = vmatprep.subr.mxu0 %v420
    %1540 = vmatpush1.msra.mxu0 %v419
    %1541 = vmatprep.subr.mxu0 %v416
    %1542 = vmatpush1.msra.mxu0 %v415
    %1543 = vmatprep.subr.mxu0 %v412
    %1544 = vmatpush1.msra.mxu0 %v411
    %1545 = vmatprep.subr.mxu0 %v408
    %1546 = vmatpush1.msra.mxu0 %v407
    %1547 = vmatprep.subr.mxu0 0.0
    %1548 = vmatpush2.msra.mxu0 0.0
    %1549 = vmatprep.subr.mxu0 0.0
    %1550 = vmatpush2.msra.mxu0 0.0
    %1551 = vmatprep.subr.mxu0 0.0
    %1552 = vmatpush2.msra.mxu0 0.0
    %1553 = vmatprep.subr.mxu0 0.0
    %1554 = vmatpush2.msra.mxu0 0.0
    %1555 = vmatprep.subr.mxu0 0.0
    %1556 = vmatpush2.msra.mxu0 0.0
    %1557 = vmatprep.subr.mxu0 0.0
    %1558 = vmatpush2.msra.mxu0 0.0
    %1559 = vmatprep.subr.mxu0 0.0
    %1560 = vmatpush2.msra.mxu0 0.0
    %1561 = vmatprep.subr.mxu0 0.0
    %1562 = vmatpush2.msra.mxu0 0.0
    %1563 = vmatprep.subr.mxu0 0.0
    %1564 = vmatpush2.msra.mxu0 0.0
    %1565 = vmatprep.subr.mxu0 0.0
    %1566 = vmatpush2.msra.mxu0 0.0
    %1567 = vmatprep.subr.mxu0 0.0
    %1568 = vmatpush2.msra.mxu0 0.0
    %1569 = vmatprep.subr.mxu0 0.0
    %1570 = vmatpush2.msra.mxu0 0.0
    %1571 = vmatprep.subr.mxu0 0.0
    %1572 = vmatpush2.msra.mxu0 0.0
    %1573 = vmatprep.subr.mxu0 0.0
    %1574 = vmatpush2.msra.mxu0 0.0
    %1575 = vmatprep.subr.mxu0 0.0
    %1576 = vmatpush2.msra.mxu0 0.0
    %1577 = vmatprep.subr.mxu0 0.0
    %1578 = vmatpush2.msra.mxu0 0.0
    %1579 = vmatprep.mubr.f32.mxu0 0.0
    %1580 = vmatmul.mubr.f32.gmra.mxu0 %v1510
    %v1581 = vpop.f32.mrf.mxu0
    %v1582 = vadd.f32 0.0, %v1581
    %v1583 = vpop.f32.mrf.mxu0
    %v1584 = vadd.f32 0.0, %v1583
    %1585 = vdwg.mxu0
    %1586 = vmatprep.subr.mxu0 %v470
    %1587 = vmatpush1.msra.mxu0 %v469
    %1588 = vmatprep.subr.mxu0 %v466
    %1589 = vmatpush1.msra.mxu0 %v465
    %1590 = vmatprep.subr.mxu0 %v462
    %1591 = vmatpush1.msra.mxu0 %v461
    %1592 = vmatprep.subr.mxu0 %v458
    %1593 = vmatpush1.msra.mxu0 %v457
    %1594 = vmatprep.subr.mxu0 %v454
    %1595 = vmatpush1.msra.mxu0 %v453
    %1596 = vmatprep.subr.mxu0 %v450
    %1597 = vmatpush1.msra.mxu0 %v449
    %1598 = vmatprep.subr.mxu0 %v446
    %1599 = vmatpush1.msra.mxu0 %v445
    %1600 = vmatprep.subr.mxu0 %v442
    %1601 = vmatpush1.msra.mxu0 %v441
    %1602 = vmatprep.subr.mxu0 %v438
    %1603 = vmatpush1.msra.mxu0 %v437
    %1604 = vmatprep.subr.mxu0 %v434
    %1605 = vmatpush1.msra.mxu0 %v433
    %1606 = vmatprep.subr.mxu0 %v430
    %1607 = vmatpush1.msra.mxu0 %v429
    %1608 = vmatprep.subr.mxu0 %v426
    %1609 = vmatpush1.msra.mxu0 %v425
    %1610 = vmatprep.subr.mxu0 %v422
    %1611 = vmatpush1.msra.mxu0 %v421
    %1612 = vmatprep.subr.mxu0 %v418
    %1613 = vmatpush1.msra.mxu0 %v417
    %1614 = vmatprep.subr.mxu0 %v414
    %1615 = vmatpush1.msra.mxu0 %v413
    %1616 = vmatprep.subr.mxu0 %v410
    %1617 = vmatpush1.msra.mxu0 %v409
    %1618 = vmatprep.subr.mxu0 0.0
    %1619 = vmatpush2.msra.mxu0 0.0
    %1620 = vmatprep.subr.mxu0 0.0
    %1621 = vmatpush2.msra.mxu0 0.0
    %1622 = vmatprep.subr.mxu0 0.0
    %1623 = vmatpush2.msra.mxu0 0.0
    %1624 = vmatprep.subr.mxu0 0.0
    %1625 = vmatpush2.msra.mxu0 0.0
    %1626 = vmatprep.subr.mxu0 0.0
    %1627 = vmatpush2.msra.mxu0 0.0
    %1628 = vmatprep.subr.mxu0 0.0
    %1629 = vmatpush2.msra.mxu0 0.0
    %1630 = vmatprep.subr.mxu0 0.0
    %1631 = vmatpush2.msra.mxu0 0.0
    %1632 = vmatprep.subr.mxu0 0.0
    %1633 = vmatpush2.msra.mxu0 0.0
    %1634 = vmatprep.subr.mxu0 0.0
    %1635 = vmatpush2.msra.mxu0 0.0
    %1636 = vmatprep.subr.mxu0 0.0
    %1637 = vmatpush2.msra.mxu0 0.0
    %1638 = vmatprep.subr.mxu0 0.0
    %1639 = vmatpush2.msra.mxu0 0.0
    %1640 = vmatprep.subr.mxu0 0.0
    %1641 = vmatpush2.msra.mxu0 0.0
    %1642 = vmatprep.subr.mxu0 0.0
    %1643 = vmatpush2.msra.mxu0 0.0
    %1644 = vmatprep.subr.mxu0 0.0
    %1645 = vmatpush2.msra.mxu0 0.0
    %1646 = vmatprep.subr.mxu0 0.0
    %1647 = vmatpush2.msra.mxu0 0.0
    %1648 = vmatprep.subr.mxu0 0.0
    %1649 = vmatpush2.msra.mxu0 0.0
    %1650 = vmatprep.mubr.f32.mxu0 0.0
    %1651 = vmatmul.mubr.f32.gmra.mxu0 %v1510
    %v1652 = vpop.f32.mrf.mxu0
    %v1653 = vadd.f32 0.0, %v1652
    %v1654 = vpop.f32.mrf.mxu0
    %v1655 = vadd.f32 0.0, %v1654
    %1656 = vdwg.mxu0
    %v1657 = vadd.f32 %v1511, %v1582
    %v1658 = vadd.f32 %v1512, %v1584
    %v1659 = vadd.f32 %v1513, %v1653
    %v1660 = vadd.f32 %v1514, %v1655
    %v1661 = vxor.u32 %v1657, 2147483648
    %v1662 = vxor.u32 %v1658, 2147483648
    %v1663 = vxor.u32 %v1659, 2147483648
    %v1664 = vmul.f32 %v1661, 1.442695
    %v1665 = vpow.pop %v1664
    %v1666 = vmul.f32 %v1662, 1.442695
    %v1667 = vpow.pop %v1666
    %v1668 = vmul.f32 %v1663, 1.442695
    %v1669 = vpow.pop %v1668
    %v1670 = vadd.f32 %v1665, 1.0
    %v1671 = vadd.f32 %v1667, 1.0
    %v1672 = vadd.f32 %v1669, 1.0
    %v1673 = vrcp.pop %v1670
    %v1674 = vmul.f32 1.0, %v1673
    %v1675 = vrcp.pop %v1671
    %v1676 = vmul.f32 1.0, %v1675
    %v1677 = vrcp.pop %v1672
    %v1678 = vmul.f32 1.0, %v1677
    %v1679 = vtanh.pop %v1660
    %v1680 = vmul.f32 %v1676, %v1508
    %v1681 = vmul.f32 %v1674, %v1679
    %v1682 = vadd.f32 %v1680, %v1681
    %v1683 = vtanh.pop %v1682
    %v1684 = vmul.f32 %v1678, %v1683
    %v1685 = vld [vmem:[#allocation2 + $0xe0] sm:$0xff]
    %v1686 = vld [vmem:[#allocation2 + $0xe8] sm:$0xff]
    %v1687 = vld [vmem:[#allocation2 + $0xf0] sm:$0xff]
    %v1688 = vld [vmem:[#allocation2 + $0xf8] sm:$0xff]
    %1689 = vmatprep.subr.mxu0 %v468
    %1690 = vmatpush1.msra.mxu0 %v467
    %1691 = vmatprep.subr.mxu0 %v464
    %1692 = vmatpush1.msra.mxu0 %v463
    %1693 = vmatprep.subr.mxu0 %v460
    %1694 = vmatpush1.msra.mxu0 %v459
    %1695 = vmatprep.subr.mxu0 %v456
    %1696 = vmatpush1.msra.mxu0 %v455
    %1697 = vmatprep.subr.mxu0 %v452
    %1698 = vmatpush1.msra.mxu0 %v451
    %1699 = vmatprep.subr.mxu0 %v448
    %1700 = vmatpush1.msra.mxu0 %v447
    %1701 = vmatprep.subr.mxu0 %v444
    %1702 = vmatpush1.msra.mxu0 %v443
    %1703 = vmatprep.subr.mxu0 %v440
    %1704 = vmatpush1.msra.mxu0 %v439
    %1705 = vmatprep.subr.mxu0 %v436
    %1706 = vmatpush1.msra.mxu0 %v435
    %1707 = vmatprep.subr.mxu0 %v432
    %1708 = vmatpush1.msra.mxu0 %v431
    %1709 = vmatprep.subr.mxu0 %v428
    %1710 = vmatpush1.msra.mxu0 %v427
    %1711 = vmatprep.subr.mxu0 %v424
    %1712 = vmatpush1.msra.mxu0 %v423
    %1713 = vmatprep.subr.mxu0 %v420
    %1714 = vmatpush1.msra.mxu0 %v419
    %1715 = vmatprep.subr.mxu0 %v416
    %1716 = vmatpush1.msra.mxu0 %v415
    %1717 = vmatprep.subr.mxu0 %v412
    %1718 = vmatpush1.msra.mxu0 %v411
    %1719 = vmatprep.subr.mxu0 %v408
    %1720 = vmatpush1.msra.mxu0 %v407
    %1721 = vmatprep.subr.mxu0 0.0
    %1722 = vmatpush2.msra.mxu0 0.0
    %1723 = vmatprep.subr.mxu0 0.0
    %1724 = vmatpush2.msra.mxu0 0.0
    %1725 = vmatprep.subr.mxu0 0.0
    %1726 = vmatpush2.msra.mxu0 0.0
    %1727 = vmatprep.subr.mxu0 0.0
    %1728 = vmatpush2.msra.mxu0 0.0
    %1729 = vmatprep.subr.mxu0 0.0
    %1730 = vmatpush2.msra.mxu0 0.0
    %1731 = vmatprep.subr.mxu0 0.0
    %1732 = vmatpush2.msra.mxu0 0.0
    %1733 = vmatprep.subr.mxu0 0.0
    %1734 = vmatpush2.msra.mxu0 0.0
    %1735 = vmatprep.subr.mxu0 0.0
    %1736 = vmatpush2.msra.mxu0 0.0
    %1737 = vmatprep.subr.mxu0 0.0
    %1738 = vmatpush2.msra.mxu0 0.0
    %1739 = vmatprep.subr.mxu0 0.0
    %1740 = vmatpush2.msra.mxu0 0.0
    %1741 = vmatprep.subr.mxu0 0.0
    %1742 = vmatpush2.msra.mxu0 0.0
    %1743 = vmatprep.subr.mxu0 0.0
    %1744 = vmatpush2.msra.mxu0 0.0
    %1745 = vmatprep.subr.mxu0 0.0
    %1746 = vmatpush2.msra.mxu0 0.0
    %1747 = vmatprep.subr.mxu0 0.0
    %1748 = vmatpush2.msra.mxu0 0.0
    %1749 = vmatprep.subr.mxu0 0.0
    %1750 = vmatpush2.msra.mxu0 0.0
    %1751 = vmatprep.subr.mxu0 0.0
    %1752 = vmatpush2.msra.mxu0 0.0
    %1753 = vmatprep.mubr.f32.mxu0 0.0
    %1754 = vmatmul.mubr.f32.gmra.mxu0 %v1684
    %v1755 = vpop.f32.mrf.mxu0
    %v1756 = vadd.f32 0.0, %v1755
    %v1757 = vpop.f32.mrf.mxu0
    %v1758 = vadd.f32 0.0, %v1757
    %1759 = vdwg.mxu0
    %1760 = vmatprep.subr.mxu0 %v470
    %1761 = vmatpush1.msra.mxu0 %v469
    %1762 = vmatprep.subr.mxu0 %v466
    %1763 = vmatpush1.msra.mxu0 %v465
    %1764 = vmatprep.subr.mxu0 %v462
    %1765 = vmatpush1.msra.mxu0 %v461
    %1766 = vmatprep.subr.mxu0 %v458
    %1767 = vmatpush1.msra.mxu0 %v457
    %1768 = vmatprep.subr.mxu0 %v454
    %1769 = vmatpush1.msra.mxu0 %v453
    %1770 = vmatprep.subr.mxu0 %v450
    %1771 = vmatpush1.msra.mxu0 %v449
    %1772 = vmatprep.subr.mxu0 %v446
    %1773 = vmatpush1.msra.mxu0 %v445
    %1774 = vmatprep.subr.mxu0 %v442
    %1775 = vmatpush1.msra.mxu0 %v441
    %1776 = vmatprep.subr.mxu0 %v438
    %1777 = vmatpush1.msra.mxu0 %v437
    %1778 = vmatprep.subr.mxu0 %v434
    %1779 = vmatpush1.msra.mxu0 %v433
    %1780 = vmatprep.subr.mxu0 %v430
    %1781 = vmatpush1.msra.mxu0 %v429
    %1782 = vmatprep.subr.mxu0 %v426
    %1783 = vmatpush1.msra.mxu0 %v425
    %1784 = vmatprep.subr.mxu0 %v422
    %1785 = vmatpush1.msra.mxu0 %v421
    %1786 = vmatprep.subr.mxu0 %v418
    %1787 = vmatpush1.msra.mxu0 %v417
    %1788 = vmatprep.subr.mxu0 %v414
    %1789 = vmatpush1.msra.mxu0 %v413
    %1790 = vmatprep.subr.mxu0 %v410
    %1791 = vmatpush1.msra.mxu0 %v409
    %1792 = vmatprep.subr.mxu0 0.0
    %1793 = vmatpush2.msra.mxu0 0.0
    %1794 = vmatprep.subr.mxu0 0.0
    %1795 = vmatpush2.msra.mxu0 0.0
    %1796 = vmatprep.subr.mxu0 0.0
    %1797 = vmatpush2.msra.mxu0 0.0
    %1798 = vmatprep.subr.mxu0 0.0
    %1799 = vmatpush2.msra.mxu0 0.0
    %1800 = vmatprep.subr.mxu0 0.0
    %1801 = vmatpush2.msra.mxu0 0.0
    %1802 = vmatprep.subr.mxu0 0.0
    %1803 = vmatpush2.msra.mxu0 0.0
    %1804 = vmatprep.subr.mxu0 0.0
    %1805 = vmatpush2.msra.mxu0 0.0
    %1806 = vmatprep.subr.mxu0 0.0
    %1807 = vmatpush2.msra.mxu0 0.0
    %1808 = vmatprep.subr.mxu0 0.0
    %1809 = vmatpush2.msra.mxu0 0.0
    %1810 = vmatprep.subr.mxu0 0.0
    %1811 = vmatpush2.msra.mxu0 0.0
    %1812 = vmatprep.subr.mxu0 0.0
    %1813 = vmatpush2.msra.mxu0 0.0
    %1814 = vmatprep.subr.mxu0 0.0
    %1815 = vmatpush2.msra.mxu0 0.0
    %1816 = vmatprep.subr.mxu0 0.0
    %1817 = vmatpush2.msra.mxu0 0.0
    %1818 = vmatprep.subr.mxu0 0.0
    %1819 = vmatpush2.msra.mxu0 0.0
    %1820 = vmatprep.subr.mxu0 0.0
    %1821 = vmatpush2.msra.mxu0 0.0
    %1822 = vmatprep.subr.mxu0 0.0
    %1823 = vmatpush2.msra.mxu0 0.0
    %1824 = vmatprep.mubr.f32.mxu0 0.0
    %1825 = vmatmul.mubr.f32.gmra.mxu0 %v1684
    %v1826 = vpop.f32.mrf.mxu0
    %v1827 = vadd.f32 0.0, %v1826
    %v1828 = vpop.f32.mrf.mxu0
    %v1829 = vadd.f32 0.0, %v1828
    %1830 = vdwg.mxu0
    %v1831 = vadd.f32 %v1685, %v1756
    %v1832 = vadd.f32 %v1686, %v1758
    %v1833 = vadd.f32 %v1687, %v1827
    %v1834 = vadd.f32 %v1688, %v1829
    %v1835 = vxor.u32 %v1831, 2147483648
    %v1836 = vxor.u32 %v1832, 2147483648
    %v1837 = vxor.u32 %v1833, 2147483648
    %v1838 = vmul.f32 %v1835, 1.442695
    %v1839 = vpow.pop %v1838
    %v1840 = vmul.f32 %v1836, 1.442695
    %v1841 = vpow.pop %v1840
    %v1842 = vmul.f32 %v1837, 1.442695
    %v1843 = vpow.pop %v1842
    %v1844 = vadd.f32 %v1839, 1.0
    %v1845 = vadd.f32 %v1841, 1.0
    %v1846 = vadd.f32 %v1843, 1.0
    %v1847 = vrcp.pop %v1844
    %v1848 = vmul.f32 1.0, %v1847
    %v1849 = vrcp.pop %v1845
    %v1850 = vmul.f32 1.0, %v1849
    %v1851 = vrcp.pop %v1846
    %v1852 = vmul.f32 1.0, %v1851
    %v1853 = vtanh.pop %v1834
    %v1854 = vmul.f32 %v1850, %v1682
    %v1855 = vmul.f32 %v1848, %v1853
    %v1856 = vadd.f32 %v1854, %v1855
    %v1857 = vtanh.pop %v1856
    %v1858 = vmul.f32 %v1852, %v1857
    %v1859 = vld [vmem:[%s4] sm:$0xff]
    %v1860 = vld [vmem:[%s4 + $0x8] sm:$0xff]
    %v1861 = vld [vmem:[%s4 + $0x10] sm:$0xff]
    %v1862 = vld [vmem:[%s4 + $0x18] sm:$0xff]
    %v1863 = vld [vmem:[%s4 + $0x20] sm:$0xff]
    %v1864 = vld [vmem:[%s4 + $0x28] sm:$0xff]
    %v1865 = vld [vmem:[%s4 + $0x30] sm:$0xff]
    %v1866 = vld [vmem:[%s4 + $0x38] sm:$0xff]
    %v1867 = vld [vmem:[%s4 + $0x40] sm:$0xff]
    %v1868 = vld [vmem:[%s4 + $0x48] sm:$0xff]
    %v1869 = vld [vmem:[%s4 + $0x50] sm:$0xff]
    %v1870 = vld [vmem:[%s4 + $0x58] sm:$0xff]
    %v1871 = vld [vmem:[%s4 + $0x60] sm:$0xff]
    %v1872 = vld [vmem:[%s4 + $0x68] sm:$0xff]
    %v1873 = vld [vmem:[%s4 + $0x70] sm:$0xff]
    %v1874 = vld [vmem:[%s4 + $0x78] sm:$0xff]
    %v1875 = vld [vmem:[%s5] sm:$0x1]
    %v1877 = vlaneseq
    %v1878 = vshrl.u32 %v1877, 7
    %v1879 = vsub.s32 0, %v1878
    %v1880 = vrot.slane %v1875, %v1879
    %1882 = vmatprep.subr.mxu0 0.0
    %1883 = vmatpush1.msra.mxu0 %v1874
    %1884 = vmatprep.subr.mxu0 0.0
    %1885 = vmatpush1.msra.mxu0 %v1873
    %1886 = vmatprep.subr.mxu0 0.0
    %1887 = vmatpush1.msra.mxu0 %v1872
    %1888 = vmatprep.subr.mxu0 0.0
    %1889 = vmatpush1.msra.mxu0 %v1871
    %1890 = vmatprep.subr.mxu0 0.0
    %1891 = vmatpush1.msra.mxu0 %v1870
    %1892 = vmatprep.subr.mxu0 0.0
    %1893 = vmatpush1.msra.mxu0 %v1869
    %1894 = vmatprep.subr.mxu0 0.0
    %1895 = vmatpush1.msra.mxu0 %v1868
    %1896 = vmatprep.subr.mxu0 0.0
    %1897 = vmatpush1.msra.mxu0 %v1867
    %1898 = vmatprep.subr.mxu0 0.0
    %1899 = vmatpush1.msra.mxu0 %v1866
    %1900 = vmatprep.subr.mxu0 0.0
    %1901 = vmatpush1.msra.mxu0 %v1865
    %1902 = vmatprep.subr.mxu0 0.0
    %1903 = vmatpush1.msra.mxu0 %v1864
    %1904 = vmatprep.subr.mxu0 0.0
    %1905 = vmatpush1.msra.mxu0 %v1863
    %1906 = vmatprep.subr.mxu0 0.0
    %1907 = vmatpush1.msra.mxu0 %v1862
    %1908 = vmatprep.subr.mxu0 0.0
    %1909 = vmatpush1.msra.mxu0 %v1861
    %1910 = vmatprep.subr.mxu0 0.0
    %1911 = vmatpush1.msra.mxu0 %v1860
    %1912 = vmatprep.subr.mxu0 0.0
    %1913 = vmatpush1.msra.mxu0 %v1859
    %1914 = vmatprep.subr.mxu0 0.0
    %1915 = vmatpush2.msra.mxu0 0.0
    %1916 = vmatprep.subr.mxu0 0.0
    %1917 = vmatpush2.msra.mxu0 0.0
    %1918 = vmatprep.subr.mxu0 0.0
    %1919 = vmatpush2.msra.mxu0 0.0
    %1920 = vmatprep.subr.mxu0 0.0
    %1921 = vmatpush2.msra.mxu0 0.0
    %1922 = vmatprep.subr.mxu0 0.0
    %1923 = vmatpush2.msra.mxu0 0.0
    %1924 = vmatprep.subr.mxu0 0.0
    %1925 = vmatpush2.msra.mxu0 0.0
    %1926 = vmatprep.subr.mxu0 0.0
    %1927 = vmatpush2.msra.mxu0 0.0
    %1928 = vmatprep.subr.mxu0 0.0
    %1929 = vmatpush2.msra.mxu0 0.0
    %1930 = vmatprep.subr.mxu0 0.0
    %1931 = vmatpush2.msra.mxu0 0.0
    %1932 = vmatprep.subr.mxu0 0.0
    %1933 = vmatpush2.msra.mxu0 0.0
    %1934 = vmatprep.subr.mxu0 0.0
    %1935 = vmatpush2.msra.mxu0 0.0
    %1936 = vmatprep.subr.mxu0 0.0
    %1937 = vmatpush2.msra.mxu0 0.0
    %1938 = vmatprep.subr.mxu0 0.0
    %1939 = vmatpush2.msra.mxu0 0.0
    %1940 = vmatprep.subr.mxu0 0.0
    %1941 = vmatpush2.msra.mxu0 0.0
    %1942 = vmatprep.subr.mxu0 0.0
    %1943 = vmatpush2.msra.mxu0 0.0
    %1944 = vmatprep.subr.mxu0 0.0
    %1945 = vmatpush2.msra.mxu0 0.0
    %1946 = vmatprep.mubr.f32.mxu0 0.0
    %1947 = vmatmul.mubr.f32.gmra.mxu0 %v1336
    %v1948 = vpop.f32.mrf.mxu0
    %v1949 = vadd.f32 %v1880, %v1948
    %v1950 = vpop.f32.mrf.mxu0
    %1951 = vmatprep.mubr.f32.mxu0 0.0
    %1952 = vmatmul.mubr.f32.gmra.mxu0 %v1510
    %v1953 = vpop.f32.mrf.mxu0
    %v1954 = vadd.f32 %v1880, %v1953
    %v1955 = vpop.f32.mrf.mxu0
    %1956 = vmatprep.mubr.f32.mxu0 0.0
    %1957 = vmatmul.mubr.f32.gmra.mxu0 %v1684
    %v1958 = vpop.f32.mrf.mxu0
    %v1959 = vadd.f32 %v1880, %v1958
    %v1960 = vpop.f32.mrf.mxu0
    %1961 = vmatprep.mubr.f32.mxu0 0.0
    %1962 = vmatmul.mubr.f32.gmra.mxu0 %v1858
    %v1963 = vpop.f32.mrf.mxu0
    %v1964 = vadd.f32 %v1880, %v1963
    %v1965 = vpop.f32.mrf.mxu0
    %1966 = vdwg.mxu0
    %v1967 = vtanh.pop %v1949
    %v1968 = vtanh.pop %v1954
    %v1969 = vtanh.pop %v1959
    %v1970 = vtanh.pop %v1964
    %v1971 = vld [vmem:[#allocation8] sm:$0xff]
    %v1972 = vld [vmem:[#allocation8 + $0x8] sm:$0xff]
    %v1973 = vld [vmem:[#allocation8 + $0x10] sm:$0xff]
    %v1974 = vld [vmem:[#allocation8 + $0x18] sm:$0xff]
    %v1975 = vld [vmem:[#allocation8 + $0x20] sm:$0xff]
    %v1976 = vld [vmem:[#allocation8 + $0x28] sm:$0xff]
    %v1977 = vld [vmem:[#allocation8 + $0x30] sm:$0xff]
    %v1978 = vld [vmem:[#allocation8 + $0x38] sm:$0xff]
    %v1979 = vld [vmem:[#allocation8 + $0x40] sm:$0xff]
    %v1980 = vld [vmem:[#allocation8 + $0x48] sm:$0xff]
    %v1981 = vld [vmem:[#allocation8 + $0x50] sm:$0xff]
    %v1982 = vld [vmem:[#allocation8 + $0x58] sm:$0xff]
    %v1983 = vld [vmem:[#allocation8 + $0x60] sm:$0xff]
    %v1984 = vld [vmem:[#allocation8 + $0x68] sm:$0xff]
    %v1985 = vld [vmem:[#allocation8 + $0x70] sm:$0xff]
    %v1986 = vld [vmem:[#allocation8 + $0x78] sm:$0xff]
    %v1987 = vld [vmem:[%s7] sm:$0x1]
    %v1989 = vlaneseq
    %v1990 = vshrl.u32 %v1989, 7
    %v1991 = vsub.s32 0, %v1990
    %v1992 = vrot.slane %v1987, %v1991
    %1994 = vmatprep.subr.mxu0 0.0
    %1995 = vmatpush1.msra.mxu0 %v1986
    %1996 = vmatprep.subr.mxu0 0.0
    %1997 = vmatpush1.msra.mxu0 %v1985
    %1998 = vmatprep.subr.mxu0 0.0
    %1999 = vmatpush1.msra.mxu0 %v1984
    %2000 = vmatprep.subr.mxu0 0.0
    %2001 = vmatpush1.msra.mxu0 %v1983
    %2002 = vmatprep.subr.mxu0 0.0
    %2003 = vmatpush1.msra.mxu0 %v1982
    %2004 = vmatprep.subr.mxu0 0.0
    %2005 = vmatpush1.msra.mxu0 %v1981
    %2006 = vmatprep.subr.mxu0 0.0
    %2007 = vmatpush1.msra.mxu0 %v1980
    %2008 = vmatprep.subr.mxu0 0.0
    %2009 = vmatpush1.msra.mxu0 %v1979
    %2010 = vmatprep.subr.mxu0 0.0
    %2011 = vmatpush1.msra.mxu0 %v1978
    %2012 = vmatprep.subr.mxu0 0.0
    %2013 = vmatpush1.msra.mxu0 %v1977
    %2014 = vmatprep.subr.mxu0 0.0
    %2015 = vmatpush1.msra.mxu0 %v1976
    %2016 = vmatprep.subr.mxu0 0.0
    %2017 = vmatpush1.msra.mxu0 %v1975
    %2018 = vmatprep.subr.mxu0 0.0
    %2019 = vmatpush1.msra.mxu0 %v1974
    %2020 = vmatprep.subr.mxu0 0.0
    %2021 = vmatpush1.msra.mxu0 %v1973
    %2022 = vmatprep.subr.mxu0 0.0
    %2023 = vmatpush1.msra.mxu0 %v1972
    %2024 = vmatprep.subr.mxu0 0.0
    %2025 = vmatpush1.msra.mxu0 %v1971
    %2026 = vmatprep.subr.mxu0 0.0
    %2027 = vmatpush2.msra.mxu0 0.0
    %2028 = vmatprep.subr.mxu0 0.0
    %2029 = vmatpush2.msra.mxu0 0.0
    %2030 = vmatprep.subr.mxu0 0.0
    %2031 = vmatpush2.msra.mxu0 0.0
    %2032 = vmatprep.subr.mxu0 0.0
    %2033 = vmatpush2.msra.mxu0 0.0
    %2034 = vmatprep.subr.mxu0 0.0
    %2035 = vmatpush2.msra.mxu0 0.0
    %2036 = vmatprep.subr.mxu0 0.0
    %2037 = vmatpush2.msra.mxu0 0.0
    %2038 = vmatprep.subr.mxu0 0.0
    %2039 = vmatpush2.msra.mxu0 0.0
    %2040 = vmatprep.subr.mxu0 0.0
    %2041 = vmatpush2.msra.mxu0 0.0
    %2042 = vmatprep.subr.mxu0 0.0
    %2043 = vmatpush2.msra.mxu0 0.0
    %2044 = vmatprep.subr.mxu0 0.0
    %2045 = vmatpush2.msra.mxu0 0.0
    %2046 = vmatprep.subr.mxu0 0.0
    %2047 = vmatpush2.msra.mxu0 0.0
    %2048 = vmatprep.subr.mxu0 0.0
    %2049 = vmatpush2.msra.mxu0 0.0
    %2050 = vmatprep.subr.mxu0 0.0
    %2051 = vmatpush2.msra.mxu0 0.0
    %2052 = vmatprep.subr.mxu0 0.0
    %2053 = vmatpush2.msra.mxu0 0.0
    %2054 = vmatprep.subr.mxu0 0.0
    %2055 = vmatpush2.msra.mxu0 0.0
    %2056 = vmatprep.subr.mxu0 0.0
    %2057 = vmatpush2.msra.mxu0 0.0
    %2058 = vmatprep.mubr.f32.mxu0 0.0
    %2059 = vmatmul.mubr.f32.gmra.mxu0 %v1967
    %v2060 = vpop.f32.mrf.mxu0
    %v2061 = vadd.f32 %v1992, %v2060
    %v2062 = vpop.f32.mrf.mxu0
    %2063 = vmatprep.mubr.f32.mxu0 0.0
    %2064 = vmatmul.mubr.f32.gmra.mxu0 %v1968
    %v2065 = vpop.f32.mrf.mxu0
    %v2066 = vadd.f32 %v1992, %v2065
    %v2067 = vpop.f32.mrf.mxu0
    %2068 = vmatprep.mubr.f32.mxu0 0.0
    %2069 = vmatmul.mubr.f32.gmra.mxu0 %v1969
    %v2070 = vpop.f32.mrf.mxu0
    %v2071 = vadd.f32 %v1992, %v2070
    %v2072 = vpop.f32.mrf.mxu0
    %2073 = vmatprep.mubr.f32.mxu0 0.0
    %2074 = vmatmul.mubr.f32.gmra.mxu0 %v1970
    %v2075 = vpop.f32.mrf.mxu0
    %v2076 = vadd.f32 %v1992, %v2075
    %v2077 = vpop.f32.mrf.mxu0
    %2078 = vdwg.mxu0
    %v2079 = vxor.u32 %v2061, 2147483648
    %v2080 = vxor.u32 %v2066, 2147483648
    %v2081 = vxor.u32 %v2071, 2147483648
    %v2082 = vxor.u32 %v2076, 2147483648
    %v2083 = vmul.f32 %v2079, 1.442695
    %v2084 = vpow.pop %v2083
    %v2085 = vmul.f32 %v2080, 1.442695
    %v2086 = vpow.pop %v2085
    %v2087 = vmul.f32 %v2081, 1.442695
    %v2088 = vpow.pop %v2087
    %v2089 = vmul.f32 %v2082, 1.442695
    %v2090 = vpow.pop %v2089
    %v2091 = vadd.f32 %v2084, 1.0
    %v2092 = vadd.f32 %v2086, 1.0
    %v2093 = vadd.f32 %v2088, 1.0
    %v2094 = vadd.f32 %v2090, 1.0
    %v2095 = vrcp.pop %v2091
    %v2096 = vmul.f32 1.0, %v2095
    %v2097 = vrcp.pop %v2092
    %v2098 = vmul.f32 1.0, %v2097
    %v2099 = vrcp.pop %v2093
    %v2100 = vmul.f32 1.0, %v2099
    %v2101 = vrcp.pop %v2094
    %v2102 = vmul.f32 1.0, %v2101
    %2103 = vst [vmem:[%s8] sm:$0xff] %v2096
    %2104 = vst [vmem:[%s8 + $0x8] sm:$0xff] %v2098
    %2105 = vst [vmem:[%s8 + $0x10] sm:$0xff] %v2100
    %2106 = vst [vmem:[%s8 + $0x18] sm:$0xff] %v2102
    // Predicated region
    $region50: #{network_forward.1} parent=1 // pred_check
      _
    $region51: #{network_forward.1} parent=1 // pred_check_branch
      %2108 = sbr.rel (0) target = $region53
    $region52: #{network_forward.1} parent=1 // pred_region
      _
    $region53: #{network_forward.1} parent=1 // pred_fallthru
      _
    // Predicated region
    $region54: #{network_forward.1} parent=1 // pred_check
      _
    $region55: #{network_forward.1} parent=1 // pred_check_branch
      %2110 = sbr.rel (0) target = $region57
    $region56: #{network_forward.1} parent=1 // pred_region
      _
    $region57: #{network_forward.1} parent=1 // pred_fallthru
      _
    %2111 = vsyncpa [#allocation4], 1
    %2112 = vsyncpa [#allocation6], 1
    %2113 = vsyncpa [#allocation9], 1

</llo_original>
